<compile_context>
chip_gen: v5e
topology: v5e:2x2
jax: 0.10.0
libtpu: 0.0.40
codegen_flags: <defaults>
</compile_context>

<pallas_src>
from functools import partial

import jax
import jax.numpy as jnp
from jax.experimental import pallas as pl
from jax.experimental.pallas import tpu as pltpu

_EPS = 1e-5


# ===========================================================================
# Fully-fused single-kernel path (whole batch resident in VMEM).
# ===========================================================================
def _fused_kernel(B, H2, W2, Cin, Cout,
                  x_ref, w1_ref, b1_ref, g1_ref, be1_ref,
                  w2_ref, b2_ref, g2_ref, be2_ref,
                  o_ref,
                  pad1_ref, pad2_ref, y1_ref):
    n = float(B * H2 * W2)
    # Zero the halo borders once; interiors are fully overwritten per image.
    pad1_ref[...] = jnp.zeros_like(pad1_ref)
    pad2_ref[...] = jnp.zeros_like(pad2_ref)

    # ---- stage 1: 2x2 max-pool + conv1 (im2col MXU matmul) ----------------
    for b in range(B):
        xb = x_ref[b]                                        # (4*H2, W2, Cin)
        pooled = jnp.maximum(
            jnp.maximum(xb[0 * H2:1 * H2], xb[1 * H2:2 * H2]),
            jnp.maximum(xb[2 * H2:3 * H2], xb[3 * H2:4 * H2]))   # (H2,W2,Cin)
        pad1_ref[1:H2 + 1, 1:W2 + 1, :] = pooled
        lhs = jnp.concatenate(
            [pad1_ref[dy:dy + H2, dx:dx + W2, :].reshape(H2 * W2, Cin)
             for dy in range(3) for dx in range(3)],
            axis=-1).astype(jnp.bfloat16)
        y1_ref[b] = (jnp.dot(lhs, w1_ref[...],
                             preferred_element_type=jnp.float32) + b1_ref[...])

    # ---- BN1 (training-mode batch stats) as per-channel affine ------------
    y1 = y1_ref[...].reshape(B * H2 * W2, Cout)
    s1 = jnp.sum(y1, axis=0, keepdims=True)
    q1 = jnp.sum(y1 * y1, axis=0, keepdims=True)
    mean1 = s1 / n
    var1 = jnp.maximum(q1 / n - mean1 * mean1, 0.0)
    scale1 = g1_ref[...] * jax.lax.rsqrt(var1 + _EPS)
    shift1 = be1_ref[...] - mean1 * scale1

    # ---- stage 2: BN1 + ReLU + conv2 (im2col MXU matmul) ------------------
    for b in range(B):
        z = jnp.maximum(y1_ref[b] * scale1 + shift1, 0.0).reshape(H2, W2, Cout)
        pad2_ref[1:H2 + 1, 1:W2 + 1, :] = z
        lhs = jnp.concatenate(
            [pad2_ref[dy:dy + H2, dx:dx + W2, :].reshape(H2 * W2, Cout)
             for dy in range(3) for dx in range(3)],
            axis=-1).astype(jnp.bfloat16)
        o_ref[b] = (jnp.dot(lhs, w2_ref[...],
                            preferred_element_type=jnp.float32) + b2_ref[...])

    # ---- BN2 + ReLU, applied in place on the output ref -------------------
    y2 = o_ref[...].reshape(B * H2 * W2, Cout)
    s2 = jnp.sum(y2, axis=0, keepdims=True)
    q2 = jnp.sum(y2 * y2, axis=0, keepdims=True)
    mean2 = s2 / n
    var2 = jnp.maximum(q2 / n - mean2 * mean2, 0.0)
    scale2 = g2_ref[...] * jax.lax.rsqrt(var2 + _EPS)
    shift2 = be2_ref[...] - mean2 * scale2
    o_ref[...] = jnp.maximum(
        o_ref[...] * scale2.reshape(1, 1, Cout) + shift2.reshape(1, 1, Cout), 0.0)


def _fused_forward(xq, w1, b1, g1, be1, w2, b2, g2, be2,
                   B, H2, W2, Cin, Cout):
    vec = lambda i: (0, 0)
    return pl.pallas_call(
        partial(_fused_kernel, B, H2, W2, Cin, Cout),
        out_shape=jax.ShapeDtypeStruct((B, H2 * W2, Cout), jnp.float32),
        grid=(1,),
        in_specs=[
            pl.BlockSpec((B, 4 * H2, W2, Cin), lambda i: (0, 0, 0, 0)),
            pl.BlockSpec((9 * Cin, Cout), vec),
            pl.BlockSpec((1, Cout), vec),
            pl.BlockSpec((1, Cout), vec),
            pl.BlockSpec((1, Cout), vec),
            pl.BlockSpec((9 * Cout, Cout), vec),
            pl.BlockSpec((1, Cout), vec),
            pl.BlockSpec((1, Cout), vec),
            pl.BlockSpec((1, Cout), vec),
        ],
        out_specs=pl.BlockSpec((B, H2 * W2, Cout), lambda i: (0, 0, 0)),
        scratch_shapes=[
            pltpu.VMEM((H2 + 2, W2 + 2, Cin), jnp.float32),    # conv1 halo pad
            pltpu.VMEM((H2 + 2, W2 + 2, Cout), jnp.float32),   # conv2 halo pad
            pltpu.VMEM((B, H2 * W2, Cout), jnp.float32),       # y1 (conv1 out)
        ],
        compiler_params=pltpu.CompilerParams(dimension_semantics=("arbitrary",)),
    )(xq, w1, b1, g1, be1, w2, b2, g2, be2)


# ===========================================================================
# Fallback 3-stage batched path (previously validated), grid over batch.
# ===========================================================================
def _pool_conv1_kernel(H2, W2, Cin, Cout,
                       x_ref, w_ref, b_ref,      # inputs
                       y_ref, st_ref,            # outputs
                       pad_ref):                 # VMEM scratch (halo pad)
    @pl.when(pl.program_id(0) == 0)
    def _():                                     # border stays zero afterwards
        pad_ref[...] = jnp.zeros_like(pad_ref)

    pooled = jnp.maximum(
        jnp.maximum(x_ref[0, 0 * H2:1 * H2], x_ref[0, 1 * H2:2 * H2]),
        jnp.maximum(x_ref[0, 2 * H2:3 * H2], x_ref[0, 3 * H2:4 * H2]))

    pad_ref[1:H2 + 1, 1:W2 + 1, :] = pooled
    taps = [pad_ref[dy:dy + H2, dx:dx + W2, :].reshape(H2 * W2, Cin)
            for dy in range(3) for dx in range(3)]
    lhs = jnp.concatenate(taps, axis=-1).astype(jnp.bfloat16)
    y = jnp.dot(lhs, w_ref[...], preferred_element_type=jnp.float32) + b_ref[...]

    y_ref[...] = y.reshape(1, H2, W2, Cout)
    st_ref[:, 0:1, :] = jnp.sum(y, axis=0, keepdims=True).reshape(1, 1, Cout)
    st_ref[:, 1:2, :] = jnp.sum(y * y, axis=0, keepdims=True).reshape(1, 1, Cout)


def _bn_relu_conv2_kernel(H2, W2, Cout,
                          y1_ref, sc_ref, sh_ref, w_ref, b_ref,   # inputs
                          y2_ref, st_ref,                         # outputs
                          pad_ref):                               # scratch
    @pl.when(pl.program_id(0) == 0)
    def _():
        pad_ref[...] = jnp.zeros_like(pad_ref)

    z = jnp.maximum(y1_ref[0] * sc_ref[...] + sh_ref[...], 0.0)   # (H2,W2,Cout)
    pad_ref[1:H2 + 1, 1:W2 + 1, :] = z
    taps = [pad_ref[dy:dy + H2, dx:dx + W2, :].reshape(H2 * W2, Cout)
            for dy in range(3) for dx in range(3)]
    lhs = jnp.concatenate(taps, axis=-1).astype(jnp.bfloat16)
    y = jnp.dot(lhs, w_ref[...], preferred_element_type=jnp.float32) + b_ref[...]

    y2_ref[...] = y.reshape(1, H2 * W2, Cout)
    st_ref[:, 0:1, :] = jnp.sum(y, axis=0, keepdims=True).reshape(1, 1, Cout)
    st_ref[:, 1:2, :] = jnp.sum(y * y, axis=0, keepdims=True).reshape(1, 1, Cout)


def _bn_relu_kernel(y_ref, sc_ref, sh_ref, o_ref):
    o_ref[...] = jnp.maximum(y_ref[...] * sc_ref[...] + sh_ref[...], 0.0)


def _bn_affine(st, gamma, beta, count):
    s = jnp.sum(st[:, 0, :], axis=0)
    ss = jnp.sum(st[:, 1, :], axis=0)
    mean = s / count
    var = jnp.maximum(ss / count - mean * mean, 0.0)
    inv = gamma * jax.lax.rsqrt(var + _EPS)
    return (inv.reshape(1, -1).astype(jnp.float32),
            (beta - mean * inv).reshape(1, -1).astype(jnp.float32))


def _staged_forward(xq, w1, b1, g1, be1, w2, b2, g2, be2,
                    B, H2, W2, Cin, Cout):
    # ---- stage A: pool + conv1 + BN1 stats --------------------------------
    y1, st1 = pl.pallas_call(
        partial(_pool_conv1_kernel, H2, W2, Cin, Cout),
        out_shape=(jax.ShapeDtypeStruct((B, H2, W2, Cout), jnp.float32),
                   jax.ShapeDtypeStruct((B, 2, Cout), jnp.float32)),
        grid=(B,),
        in_specs=[
            pl.BlockSpec((1, 4 * H2, W2, Cin), lambda b: (b, 0, 0, 0)),
            pl.BlockSpec((9 * Cin, Cout), lambda b: (0, 0)),
            pl.BlockSpec((1, Cout), lambda b: (0, 0)),
        ],
        out_specs=(
            pl.BlockSpec((1, H2, W2, Cout), lambda b: (b, 0, 0, 0)),
            pl.BlockSpec((1, 2, Cout), lambda b: (b, 0, 0)),
        ),
        scratch_shapes=[pltpu.VMEM((H2 + 2, W2 + 2, Cin), jnp.float32)],
        compiler_params=pltpu.CompilerParams(dimension_semantics=("parallel",)),
    )(xq, w1, b1)

    n = B * H2 * W2
    scale1, shift1 = _bn_affine(st1, g1, be1, n)

    # ---- stage B: BN1+ReLU + conv2 + BN2 stats -----------------------------
    y2, st2 = pl.pallas_call(
        partial(_bn_relu_conv2_kernel, H2, W2, Cout),
        out_shape=(jax.ShapeDtypeStruct((B, H2 * W2, Cout), jnp.float32),
                   jax.ShapeDtypeStruct((B, 2, Cout), jnp.float32)),
        grid=(B,),
        in_specs=[
            pl.BlockSpec((1, H2, W2, Cout), lambda b: (b, 0, 0, 0)),
            pl.BlockSpec((1, Cout), lambda b: (0, 0)),
            pl.BlockSpec((1, Cout), lambda b: (0, 0)),
            pl.BlockSpec((9 * Cout, Cout), lambda b: (0, 0)),
            pl.BlockSpec((1, Cout), lambda b: (0, 0)),
        ],
        out_specs=(
            pl.BlockSpec((1, H2 * W2, Cout), lambda b: (b, 0, 0)),
            pl.BlockSpec((1, 2, Cout), lambda b: (b, 0, 0)),
        ),
        scratch_shapes=[pltpu.VMEM((H2 + 2, W2 + 2, Cout), jnp.float32)],
        compiler_params=pltpu.CompilerParams(dimension_semantics=("parallel",)),
    )(y1, scale1, shift1, w2, b2)

    scale2, shift2 = _bn_affine(st2, g2, be2, n)

    # ---- stage C: BN2 + ReLU -----------------------------------------------
    return pl.pallas_call(
        _bn_relu_kernel,
        out_shape=jax.ShapeDtypeStruct((B, H2 * W2, Cout), jnp.float32),
        grid=(B,),
        in_specs=[
            pl.BlockSpec((1, H2 * W2, Cout), lambda b: (b, 0, 0)),
            pl.BlockSpec((1, Cout), lambda b: (0, 0)),
            pl.BlockSpec((1, Cout), lambda b: (0, 0)),
        ],
        out_specs=pl.BlockSpec((1, H2 * W2, Cout), lambda b: (b, 0, 0)),
        compiler_params=pltpu.CompilerParams(dimension_semantics=("parallel",)),
    )(y2, scale2, shift2)


# ===========================================================================
# Full forward (NCHW in / NCHW out, like the PyTorch module).
# ===========================================================================
def overlap_patch_embed_forward(x_nchw, params, *, force_staged=False):
    B, Cin, H, W = x_nchw.shape
    assert H % 2 == 0 and W % 2 == 0, "MaxPool2d(2) path assumes even H, W"
    H2, W2 = H // 2, W // 2
    Cout = params["w1"].shape[-1]

    # NCHW -> channels-last with the four 2x2-pool taps as leading row-slabs:
    #   xq[b, k*H2 + h, w, c] = x[b, c, 2*h + k//2, 2*w + k%2]
    xq = jnp.transpose(x_nchw.reshape(B, Cin, H2, 2, W2, 2),
                       (0, 3, 5, 2, 4, 1)).reshape(B, 4 * H2, W2, Cin)

    # Kernel-friendly weight layouts: (3,3,in,out) -> (9*in, out), bf16 for MXU.
    w1 = params["w1"].reshape(9 * Cin, Cout).astype(jnp.bfloat16)
    b1 = params["b1"].reshape(1, Cout).astype(jnp.float32)
    w2 = params["w2"].reshape(9 * Cout, Cout).astype(jnp.bfloat16)
    b2 = params["b2"].reshape(1, Cout).astype(jnp.float32)
    g1 = params["bn1_gamma"].reshape(1, Cout).astype(jnp.float32)
    be1 = params["bn1_beta"].reshape(1, Cout).astype(jnp.float32)
    g2 = params["bn2_gamma"].reshape(1, Cout).astype(jnp.float32)
    be2 = params["bn2_beta"].reshape(1, Cout).astype(jnp.float32)

    # Rough f32 footprint of the fully-fused kernel (x3 margin for
    # double-buffered I/O and compiler temporaries).
    fused_bytes = 3 * 4 * (B * 4 * H2 * W2 * Cin
                           + 2 * B * H2 * W2 * Cout
                           + (H2 + 2) * (W2 + 2) * (Cin + Cout))
    if (not force_staged) and fused_bytes < 16 * 1024 * 1024:
        out = _fused_forward(xq, w1, b1, g1, be1, w2, b2, g2, be2,
                             B, H2, W2, Cin, Cout)
    else:
        out = _staged_forward(xq, w1, b1, g1, be1, w2, b2, g2, be2,
                              B, H2, W2, Cin, Cout)

    out = out.reshape(B, H2, W2, Cout)
    return jnp.transpose(out, (0, 3, 1, 2))           # NHWC -> NCHW


overlap_patch_embed = jax.jit(overlap_patch_embed_forward,
                              static_argnames=("force_staged",))


# ---------------------------------------------------------------------------
# Deterministic synthetic parameters (PyTorch BN default: gamma=1, beta=0).
# Conv weights stored as (kh, kw, in, out).
# ---------------------------------------------------------------------------
def init_params(key, in_channels, out_channels):
    k = jax.random.split(key, 4)
    s1 = (2.0 / (9 * in_channels)) ** 0.5
    s2 = (2.0 / (9 * out_channels)) ** 0.5
    return {
        "w1": s1 * jax.random.normal(k[0], (3, 3, in_channels, out_channels), jnp.float32),
        "b1": 0.1 * jax.random.normal(k[1], (out_channels,), jnp.float32),
        "w2": s2 * jax.random.normal(k[2], (3, 3, out_channels, out_channels), jnp.float32),
        "b2": 0.1 * jax.random.normal(k[3], (out_channels,), jnp.float32),
        "bn1_gamma": jnp.ones((out_channels,), jnp.float32),
        "bn1_beta": jnp.zeros((out_channels,), jnp.float32),
        "bn2_gamma": jnp.ones((out_channels,), jnp.float32),
        "bn2_beta": jnp.zeros((out_channels,), jnp.float32),
    }


# ---------------------------------------------------------------------------
# Pure-JAX reference (conv inputs rounded to bf16 to mirror the MXU-native
# matmul precision used in the kernels; everything else f32).
# ---------------------------------------------------------------------------
def reference_forward(x_nchw, params):
    xp = jax.lax.reduce_window(x_nchw, -jnp.inf, jax.lax.max,
                               (1, 1, 2, 2), (1, 1, 2, 2), "VALID")

    def conv3x3(x, w4, b):
        xb = x.astype(jnp.bfloat16).astype(jnp.float32)
        wb = jnp.transpose(w4, (3, 2, 0, 1)).astype(jnp.bfloat16).astype(jnp.float32)
        y = jax.lax.conv_general_dilated(
            xb, wb, (1, 1), ((1, 1), (1, 1)),
            dimension_numbers=("NCHW", "OIHW", "NCHW"))
        return y + b.reshape(1, -1, 1, 1)

    def bn_relu(y, gamma, beta):
        mean = y.mean(axis=(0, 2, 3), keepdims=True)
        var = ((y - mean) ** 2).mean(axis=(0, 2, 3), keepdims=True)   # biased (training mode)
        z = ((y - mean) * jax.lax.rsqrt(var + _EPS)
             * gamma.reshape(1, -1, 1, 1) + beta.reshape(1, -1, 1, 1))
        return jnp.maximum(z, 0.0)

    y1 = conv3x3(xp, params["w1"], params["b1"])
    z1 = bn_relu(y1, params["bn1_gamma"], params["bn1_beta"])
    y2 = conv3x3(z1, params["w2"], params["b2"])
    return bn_relu(y2, params["bn2_gamma"], params["bn2_beta"])


if __name__ == "__main__":
    B, Cin, H, W = 2, 4, 16, 16
    Cout = 8
    key = jax.random.PRNGKey(0)
    kx, kp = jax.random.split(key)
    x = jax.random.normal(kx, (B, Cin, H, W), jnp.float32)
    params = init_params(kp, Cin, Cout)

    ref = jax.block_until_ready(reference_forward(x, params))

    out_fused = jax.block_until_ready(overlap_patch_embed(x, params))
    out_staged = jax.block_until_ready(
        overlap_patch_embed(x, params, force_staged=True))

    assert out_fused.shape == (B, Cout, H // 2, W // 2)
    for name, out in (("fused", out_fused), ("staged", out_staged)):
        max_err = float(jnp.max(jnp.abs(out - ref)))
        assert jnp.allclose(out, ref, atol=2e-2, rtol=2e-2), \
            f"{name} path mismatch vs reference, max|diff|={max_err}"
    print("KERNEL_OK")
</pallas_src>

<mosaic_0001>
module attributes {stable_mosaic.version = 11 : i64} {
  func.func @_fused_kernel(%arg0: i32, %arg1: memref<2x32x8x4xf32, #tpu.memory_space<vmem>>, %arg2: memref<36x8xbf16, #tpu.memory_space<vmem>>, %arg3: memref<1x8xf32, #tpu.memory_space<vmem>>, %arg4: memref<1x8xf32, #tpu.memory_space<vmem>>, %arg5: memref<1x8xf32, #tpu.memory_space<vmem>>, %arg6: memref<72x8xbf16, #tpu.memory_space<vmem>>, %arg7: memref<1x8xf32, #tpu.memory_space<vmem>>, %arg8: memref<1x8xf32, #tpu.memory_space<vmem>>, %arg9: memref<1x8xf32, #tpu.memory_space<vmem>>, %arg10: memref<2x64x8xf32, #tpu.memory_space<vmem>>, %arg11: memref<10x10x4xf32, #tpu.memory_space<vmem>>, %arg12: memref<10x10x8xf32, #tpu.memory_space<vmem>>, %arg13: memref<2x64x8xf32, #tpu.memory_space<vmem>>) attributes {dimension_semantics = [#tpu.dimension_semantics<arbitrary>], iteration_bounds = array<i64: 1>, scalar_prefetch = 0 : i64, scratch_operands = 3 : i64, tpu.core_type = #tpu.core_type<tc>, window_params = [{pipeline_mode = #tpu.pipeline_mode<synchronous>, transform_indices = @transform_0, window_bounds = array<i64: 2, 32, 8, 4>}, {pipeline_mode = #tpu.pipeline_mode<synchronous>, transform_indices = @transform_1, window_bounds = array<i64: 36, 8>}, {pipeline_mode = #tpu.pipeline_mode<synchronous>, transform_indices = @transform_2, window_bounds = array<i64: 1, 8>}, {pipeline_mode = #tpu.pipeline_mode<synchronous>, transform_indices = @transform_3, window_bounds = array<i64: 1, 8>}, {pipeline_mode = #tpu.pipeline_mode<synchronous>, transform_indices = @transform_4, window_bounds = array<i64: 1, 8>}, {pipeline_mode = #tpu.pipeline_mode<synchronous>, transform_indices = @transform_5, window_bounds = array<i64: 72, 8>}, {pipeline_mode = #tpu.pipeline_mode<synchronous>, transform_indices = @transform_6, window_bounds = array<i64: 1, 8>}, {pipeline_mode = #tpu.pipeline_mode<synchronous>, transform_indices = @transform_7, window_bounds = array<i64: 1, 8>}, {pipeline_mode = #tpu.pipeline_mode<synchronous>, transform_indices = @transform_8, window_bounds = array<i64: 1, 8>}, {pipeline_mode = #tpu.pipeline_mode<synchronous>, transform_indices = @transform_9, window_bounds = array<i64: 2, 64, 8>}]} {
    %cst = arith.constant 0.000000e+00 : f32
    %0 = vector.broadcast %cst : f32 to vector<10x10x4xf32>
    %c0 = arith.constant 0 : index
    %c0_0 = arith.constant 0 : index
    %c0_1 = arith.constant 0 : index
    %1 = vector.load %arg11[%c0, %c0_0, %c0_1] : memref<10x10x4xf32, #tpu.memory_space<vmem>>, vector<10x10x4xf32>
    tpu.vector_store %arg11[%c0, %c0_0, %c0_1], %0 {strides = array<i32>} : memref<10x10x4xf32, #tpu.memory_space<vmem>>, vector<10x10x4xf32>,
    %cst_2 = arith.constant 0.000000e+00 : f32
    %2 = vector.broadcast %cst_2 : f32 to vector<10x10x8xf32>
    %c0_3 = arith.constant 0 : index
    %c0_4 = arith.constant 0 : index
    %c0_5 = arith.constant 0 : index
    %3 = vector.load %arg12[%c0_3, %c0_4, %c0_5] : memref<10x10x8xf32, #tpu.memory_space<vmem>>, vector<10x10x8xf32>
    tpu.vector_store %arg12[%c0_3, %c0_4, %c0_5], %2 {strides = array<i32>} : memref<10x10x8xf32, #tpu.memory_space<vmem>>, vector<10x10x8xf32>,
    %c0_6 = arith.constant 0 : index
    %c0_7 = arith.constant 0 : index
    %c0_8 = arith.constant 0 : index
    %c0_9 = arith.constant 0 : index
    %4 = vector.load %arg1[%c0_6, %c0_7, %c0_8, %c0_9] : memref<2x32x8x4xf32, #tpu.memory_space<vmem>>, vector<1x32x8x4xf32>
    %5 = vector.shape_cast %4 : vector<1x32x8x4xf32> to vector<32x8x4xf32>
    %6 = vector.extract_strided_slice %5 {offsets = [0, 0, 0], sizes = [8, 8, 4], strides = [1, 1, 1]} : vector<32x8x4xf32> to vector<8x8x4xf32>
    %7 = vector.extract_strided_slice %5 {offsets = [8, 0, 0], sizes = [8, 8, 4], strides = [1, 1, 1]} : vector<32x8x4xf32> to vector<8x8x4xf32>
    %8 = arith.maximumf %6, %7 : vector<8x8x4xf32>
    %9 = vector.extract_strided_slice %5 {offsets = [16, 0, 0], sizes = [8, 8, 4], strides = [1, 1, 1]} : vector<32x8x4xf32> to vector<8x8x4xf32>
    %10 = vector.extract_strided_slice %5 {offsets = [24, 0, 0], sizes = [8, 8, 4], strides = [1, 1, 1]} : vector<32x8x4xf32> to vector<8x8x4xf32>
    %11 = arith.maximumf %9, %10 : vector<8x8x4xf32>
    %12 = arith.maximumf %8, %11 : vector<8x8x4xf32>
    %c1 = arith.constant 1 : index
    %c1_10 = arith.constant 1 : index
    %c0_11 = arith.constant 0 : index
    %13 = vector.load %arg11[%c1, %c1_10, %c0_11] : memref<10x10x4xf32, #tpu.memory_space<vmem>>, vector<8x8x4xf32>
    tpu.vector_store %arg11[%c1, %c1_10, %c0_11], %12 {strides = array<i32>} : memref<10x10x4xf32, #tpu.memory_space<vmem>>, vector<8x8x4xf32>,
    %c0_12 = arith.constant 0 : index
    %c0_13 = arith.constant 0 : index
    %c0_14 = arith.constant 0 : index
    %14 = vector.load %arg11[%c0_12, %c0_13, %c0_14] : memref<10x10x4xf32, #tpu.memory_space<vmem>>, vector<8x8x4xf32>
    %15 = vector.shape_cast %14 : vector<8x8x4xf32> to vector<64x4xf32>
    %c0_15 = arith.constant 0 : index
    %c1_16 = arith.constant 1 : index
    %c0_17 = arith.constant 0 : index
    %16 = vector.load %arg11[%c0_15, %c1_16, %c0_17] : memref<10x10x4xf32, #tpu.memory_space<vmem>>, vector<8x8x4xf32>
    %17 = vector.shape_cast %16 : vector<8x8x4xf32> to vector<64x4xf32>
    %c0_18 = arith.constant 0 : index
    %c2 = arith.constant 2 : index
    %c0_19 = arith.constant 0 : index
    %18 = vector.load %arg11[%c0_18, %c2, %c0_19] : memref<10x10x4xf32, #tpu.memory_space<vmem>>, vector<8x8x4xf32>
    %19 = vector.shape_cast %18 : vector<8x8x4xf32> to vector<64x4xf32>
    %c1_20 = arith.constant 1 : index
    %c0_21 = arith.constant 0 : index
    %c0_22 = arith.constant 0 : index
    %20 = vector.load %arg11[%c1_20, %c0_21, %c0_22] : memref<10x10x4xf32, #tpu.memory_space<vmem>>, vector<8x8x4xf32>
    %21 = vector.shape_cast %20 : vector<8x8x4xf32> to vector<64x4xf32>
    %c1_23 = arith.constant 1 : index
    %c1_24 = arith.constant 1 : index
    %c0_25 = arith.constant 0 : index
    %22 = vector.load %arg11[%c1_23, %c1_24, %c0_25] : memref<10x10x4xf32, #tpu.memory_space<vmem>>, vector<8x8x4xf32>
    %23 = vector.shape_cast %22 : vector<8x8x4xf32> to vector<64x4xf32>
    %c1_26 = arith.constant 1 : index
    %c2_27 = arith.constant 2 : index
    %c0_28 = arith.constant 0 : index
    %24 = vector.load %arg11[%c1_26, %c2_27, %c0_28] : memref<10x10x4xf32, #tpu.memory_space<vmem>>, vector<8x8x4xf32>
    %25 = vector.shape_cast %24 : vector<8x8x4xf32> to vector<64x4xf32>
    %c2_29 = arith.constant 2 : index
    %c0_30 = arith.constant 0 : index
    %c0_31 = arith.constant 0 : index
    %26 = vector.load %arg11[%c2_29, %c0_30, %c0_31] : memref<10x10x4xf32, #tpu.memory_space<vmem>>, vector<8x8x4xf32>
    %27 = vector.shape_cast %26 : vector<8x8x4xf32> to vector<64x4xf32>
    %c2_32 = arith.constant 2 : index
    %c1_33 = arith.constant 1 : index
    %c0_34 = arith.constant 0 : index
    %28 = vector.load %arg11[%c2_32, %c1_33, %c0_34] : memref<10x10x4xf32, #tpu.memory_space<vmem>>, vector<8x8x4xf32>
    %29 = vector.shape_cast %28 : vector<8x8x4xf32> to vector<64x4xf32>
    %c2_35 = arith.constant 2 : index
    %c2_36 = arith.constant 2 : index
    %c0_37 = arith.constant 0 : index
    %30 = vector.load %arg11[%c2_35, %c2_36, %c0_37] : memref<10x10x4xf32, #tpu.memory_space<vmem>>, vector<8x8x4xf32>
    %31 = vector.shape_cast %30 : vector<8x8x4xf32> to vector<64x4xf32>
    %32 = tpu.concatenate %15, %17, %19, %21, %23, %25, %27, %29, %31 in 1 : vector<64x4xf32>, vector<64x4xf32>, vector<64x4xf32>, vector<64x4xf32>, vector<64x4xf32>, vector<64x4xf32>, vector<64x4xf32>, vector<64x4xf32>, vector<64x4xf32> -> vector<64x36xf32>
    %33 = arith.truncf %32 : vector<64x36xf32> to vector<64x36xbf16>
    %c0_38 = arith.constant 0 : index
    %c0_39 = arith.constant 0 : index
    %34 = vector.load %arg2[%c0_38, %c0_39] : memref<36x8xbf16, #tpu.memory_space<vmem>>, vector<36x8xbf16>
    %cst_40 = arith.constant dense<0.000000e+00> : vector<64x8xf32>
    %35 = tpu.matmul %33, %34, %cst_40 {dimension_numbers = #tpu.dot_dimension_numbers<[1], [0], [0], [1], [0, 0, 1, 1], [], []>} : vector<64x36xbf16>, vector<36x8xbf16>, vector<64x8xf32> -> vector<64x8xf32>
    %c0_41 = arith.constant 0 : index
    %c0_42 = arith.constant 0 : index
    %36 = vector.load %arg3[%c0_41, %c0_42] : memref<1x8xf32, #tpu.memory_space<vmem>>, vector<1x8xf32>
    %37 = vector.broadcast %36 : vector<1x8xf32> to vector<64x8xf32>
    %38 = arith.addf %35, %37 : vector<64x8xf32>
    %c0_43 = arith.constant 0 : index
    %c0_44 = arith.constant 0 : index
    %c0_45 = arith.constant 0 : index
    %39 = vector.load %arg13[%c0_43, %c0_44, %c0_45] : memref<2x64x8xf32, #tpu.memory_space<vmem>>, vector<1x64x8xf32>
    %40 = vector.shape_cast %39 : vector<1x64x8xf32> to vector<64x8xf32>
    %41 = vector.shape_cast %38 : vector<64x8xf32> to vector<1x64x8xf32>
    tpu.vector_store %arg13[%c0_43, %c0_44, %c0_45], %41 {strides = array<i32>} : memref<2x64x8xf32, #tpu.memory_space<vmem>>, vector<1x64x8xf32>,
    %c1_46 = arith.constant 1 : index
    %c0_47 = arith.constant 0 : index
    %c0_48 = arith.constant 0 : index
    %c0_49 = arith.constant 0 : index
    %42 = vector.load %arg1[%c1_46, %c0_47, %c0_48, %c0_49] : memref<2x32x8x4xf32, #tpu.memory_space<vmem>>, vector<1x32x8x4xf32>
    %43 = vector.shape_cast %42 : vector<1x32x8x4xf32> to vector<32x8x4xf32>
    %44 = vector.extract_strided_slice %43 {offsets = [0, 0, 0], sizes = [8, 8, 4], strides = [1, 1, 1]} : vector<32x8x4xf32> to vector<8x8x4xf32>
    %45 = vector.extract_strided_slice %43 {offsets = [8, 0, 0], sizes = [8, 8, 4], strides = [1, 1, 1]} : vector<32x8x4xf32> to vector<8x8x4xf32>
    %46 = arith.maximumf %44, %45 : vector<8x8x4xf32>
    %47 = vector.extract_strided_slice %43 {offsets = [16, 0, 0], sizes = [8, 8, 4], strides = [1, 1, 1]} : vector<32x8x4xf32> to vector<8x8x4xf32>
    %48 = vector.extract_strided_slice %43 {offsets = [24, 0, 0], sizes = [8, 8, 4], strides = [1, 1, 1]} : vector<32x8x4xf32> to vector<8x8x4xf32>
    %49 = arith.maximumf %47, %48 : vector<8x8x4xf32>
    %50 = arith.maximumf %46, %49 : vector<8x8x4xf32>
    %c1_50 = arith.constant 1 : index
    %c1_51 = arith.constant 1 : index
    %c0_52 = arith.constant 0 : index
    %51 = vector.load %arg11[%c1_50, %c1_51, %c0_52] : memref<10x10x4xf32, #tpu.memory_space<vmem>>, vector<8x8x4xf32>
    tpu.vector_store %arg11[%c1_50, %c1_51, %c0_52], %50 {strides = array<i32>} : memref<10x10x4xf32, #tpu.memory_space<vmem>>, vector<8x8x4xf32>,
    %c0_53 = arith.constant 0 : index
    %c0_54 = arith.constant 0 : index
    %c0_55 = arith.constant 0 : index
    %52 = vector.load %arg11[%c0_53, %c0_54, %c0_55] : memref<10x10x4xf32, #tpu.memory_space<vmem>>, vector<8x8x4xf32>
    %53 = vector.shape_cast %52 : vector<8x8x4xf32> to vector<64x4xf32>
    %c0_56 = arith.constant 0 : index
    %c1_57 = arith.constant 1 : index
    %c0_58 = arith.constant 0 : index
    %54 = vector.load %arg11[%c0_56, %c1_57, %c0_58] : memref<10x10x4xf32, #tpu.memory_space<vmem>>, vector<8x8x4xf32>
    %55 = vector.shape_cast %54 : vector<8x8x4xf32> to vector<64x4xf32>
    %c0_59 = arith.constant 0 : index
    %c2_60 = arith.constant 2 : index
    %c0_61 = arith.constant 0 : index
    %56 = vector.load %arg11[%c0_59, %c2_60, %c0_61] : memref<10x10x4xf32, #tpu.memory_space<vmem>>, vector<8x8x4xf32>
    %57 = vector.shape_cast %56 : vector<8x8x4xf32> to vector<64x4xf32>
    %c1_62 = arith.constant 1 : index
    %c0_63 = arith.constant 0 : index
    %c0_64 = arith.constant 0 : index
    %58 = vector.load %arg11[%c1_62, %c0_63, %c0_64] : memref<10x10x4xf32, #tpu.memory_space<vmem>>, vector<8x8x4xf32>
    %59 = vector.shape_cast %58 : vector<8x8x4xf32> to vector<64x4xf32>
    %c1_65 = arith.constant 1 : index
    %c1_66 = arith.constant 1 : index
    %c0_67 = arith.constant 0 : index
    %60 = vector.load %arg11[%c1_65, %c1_66, %c0_67] : memref<10x10x4xf32, #tpu.memory_space<vmem>>, vector<8x8x4xf32>
    %61 = vector.shape_cast %60 : vector<8x8x4xf32> to vector<64x4xf32>
    %c1_68 = arith.constant 1 : index
    %c2_69 = arith.constant 2 : index
    %c0_70 = arith.constant 0 : index
    %62 = vector.load %arg11[%c1_68, %c2_69, %c0_70] : memref<10x10x4xf32, #tpu.memory_space<vmem>>, vector<8x8x4xf32>
    %63 = vector.shape_cast %62 : vector<8x8x4xf32> to vector<64x4xf32>
    %c2_71 = arith.constant 2 : index
    %c0_72 = arith.constant 0 : index
    %c0_73 = arith.constant 0 : index
    %64 = vector.load %arg11[%c2_71, %c0_72, %c0_73] : memref<10x10x4xf32, #tpu.memory_space<vmem>>, vector<8x8x4xf32>
    %65 = vector.shape_cast %64 : vector<8x8x4xf32> to vector<64x4xf32>
    %c2_74 = arith.constant 2 : index
    %c1_75 = arith.constant 1 : index
    %c0_76 = arith.constant 0 : index
    %66 = vector.load %arg11[%c2_74, %c1_75, %c0_76] : memref<10x10x4xf32, #tpu.memory_space<vmem>>, vector<8x8x4xf32>
    %67 = vector.shape_cast %66 : vector<8x8x4xf32> to vector<64x4xf32>
    %c2_77 = arith.constant 2 : index
    %c2_78 = arith.constant 2 : index
    %c0_79 = arith.constant 0 : index
    %68 = vector.load %arg11[%c2_77, %c2_78, %c0_79] : memref<10x10x4xf32, #tpu.memory_space<vmem>>, vector<8x8x4xf32>
    %69 = vector.shape_cast %68 : vector<8x8x4xf32> to vector<64x4xf32>
    %70 = tpu.concatenate %53, %55, %57, %59, %61, %63, %65, %67, %69 in 1 : vector<64x4xf32>, vector<64x4xf32>, vector<64x4xf32>, vector<64x4xf32>, vector<64x4xf32>, vector<64x4xf32>, vector<64x4xf32>, vector<64x4xf32>, vector<64x4xf32> -> vector<64x36xf32>
    %71 = arith.truncf %70 : vector<64x36xf32> to vector<64x36xbf16>
    %c0_80 = arith.constant 0 : index
    %c0_81 = arith.constant 0 : index
    %72 = vector.load %arg2[%c0_80, %c0_81] : memref<36x8xbf16, #tpu.memory_space<vmem>>, vector<36x8xbf16>
    %cst_82 = arith.constant dense<0.000000e+00> : vector<64x8xf32>
    %73 = tpu.matmul %71, %72, %cst_82 {dimension_numbers = #tpu.dot_dimension_numbers<[1], [0], [0], [1], [0, 0, 1, 1], [], []>} : vector<64x36xbf16>, vector<36x8xbf16>, vector<64x8xf32> -> vector<64x8xf32>
    %c0_83 = arith.constant 0 : index
    %c0_84 = arith.constant 0 : index
    %74 = vector.load %arg3[%c0_83, %c0_84] : memref<1x8xf32, #tpu.memory_space<vmem>>, vector<1x8xf32>
    %75 = vector.broadcast %74 : vector<1x8xf32> to vector<64x8xf32>
    %76 = arith.addf %73, %75 : vector<64x8xf32>
    %c1_85 = arith.constant 1 : index
    %c0_86 = arith.constant 0 : index
    %c0_87 = arith.constant 0 : index
    %77 = vector.load %arg13[%c1_85, %c0_86, %c0_87] : memref<2x64x8xf32, #tpu.memory_space<vmem>>, vector<1x64x8xf32>
    %78 = vector.shape_cast %77 : vector<1x64x8xf32> to vector<64x8xf32>
    %79 = vector.shape_cast %76 : vector<64x8xf32> to vector<1x64x8xf32>
    tpu.vector_store %arg13[%c1_85, %c0_86, %c0_87], %79 {strides = array<i32>} : memref<2x64x8xf32, #tpu.memory_space<vmem>>, vector<1x64x8xf32>,
    %c0_88 = arith.constant 0 : index
    %c0_89 = arith.constant 0 : index
    %c0_90 = arith.constant 0 : index
    %80 = vector.load %arg13[%c0_88, %c0_89, %c0_90] : memref<2x64x8xf32, #tpu.memory_space<vmem>>, vector<2x64x8xf32>
    %81 = vector.shape_cast %80 : vector<2x64x8xf32> to vector<128x8xf32>
    %cst_91 = arith.constant dense<0.000000e+00> : vector<8xf32>
    %82 = vector.multi_reduction <add>, %81, %cst_91 [0] : vector<128x8xf32> to vector<8xf32>
    %83 = vector.shape_cast %82 : vector<8xf32> to vector<1x8xf32>
    %84 = arith.mulf %81, %81 : vector<128x8xf32>
    %cst_92 = arith.constant dense<0.000000e+00> : vector<8xf32>
    %85 = vector.multi_reduction <add>, %84, %cst_92 [0] : vector<128x8xf32> to vector<8xf32>
    %86 = vector.shape_cast %85 : vector<8xf32> to vector<1x8xf32>
    %cst_93 = arith.constant 1.280000e+02 : f32
    %87 = vector.broadcast %cst_93 : f32 to vector<1x8xf32>
    %88 = arith.divf %83, %87 : vector<1x8xf32>
    %cst_94 = arith.constant 1.280000e+02 : f32
    %89 = vector.broadcast %cst_94 : f32 to vector<1x8xf32>
    %90 = arith.divf %86, %89 : vector<1x8xf32>
    %91 = arith.mulf %88, %88 : vector<1x8xf32>
    %92 = arith.subf %90, %91 : vector<1x8xf32>
    %cst_95 = arith.constant 0.000000e+00 : f32
    %93 = vector.broadcast %cst_95 : f32 to vector<1x8xf32>
    %94 = arith.maximumf %92, %93 : vector<1x8xf32>
    %c0_96 = arith.constant 0 : index
    %c0_97 = arith.constant 0 : index
    %95 = vector.load %arg4[%c0_96, %c0_97] : memref<1x8xf32, #tpu.memory_space<vmem>>, vector<1x8xf32>
    %cst_98 = arith.constant 9.99999974E-6 : f32
    %96 = vector.broadcast %cst_98 : f32 to vector<1x8xf32>
    %97 = arith.addf %94, %96 : vector<1x8xf32>
    %98 = math.rsqrt %97 : vector<1x8xf32>
    %99 = arith.mulf %95, %98 : vector<1x8xf32>
    %c0_99 = arith.constant 0 : index
    %c0_100 = arith.constant 0 : index
    %100 = vector.load %arg5[%c0_99, %c0_100] : memref<1x8xf32, #tpu.memory_space<vmem>>, vector<1x8xf32>
    %101 = arith.mulf %88, %99 : vector<1x8xf32>
    %102 = arith.subf %100, %101 : vector<1x8xf32>
    %c0_101 = arith.constant 0 : index
    %c0_102 = arith.constant 0 : index
    %c0_103 = arith.constant 0 : index
    %103 = vector.load %arg13[%c0_101, %c0_102, %c0_103] : memref<2x64x8xf32, #tpu.memory_space<vmem>>, vector<1x64x8xf32>
    %104 = vector.shape_cast %103 : vector<1x64x8xf32> to vector<64x8xf32>
    %105 = vector.broadcast %99 : vector<1x8xf32> to vector<64x8xf32>
    %106 = arith.mulf %104, %105 : vector<64x8xf32>
    %107 = vector.broadcast %102 : vector<1x8xf32> to vector<64x8xf32>
    %108 = arith.addf %106, %107 : vector<64x8xf32>
    %cst_104 = arith.constant 0.000000e+00 : f32
    %109 = vector.broadcast %cst_104 : f32 to vector<64x8xf32>
    %110 = arith.maximumf %108, %109 : vector<64x8xf32>
    %111 = vector.shape_cast %110 : vector<64x8xf32> to vector<8x8x8xf32>
    %c1_105 = arith.constant 1 : index
    %c1_106 = arith.constant 1 : index
    %c0_107 = arith.constant 0 : index
    %112 = vector.load %arg12[%c1_105, %c1_106, %c0_107] : memref<10x10x8xf32, #tpu.memory_space<vmem>>, vector<8x8x8xf32>
    tpu.vector_store %arg12[%c1_105, %c1_106, %c0_107], %111 {strides = array<i32>} : memref<10x10x8xf32, #tpu.memory_space<vmem>>, vector<8x8x8xf32>,
    %c0_108 = arith.constant 0 : index
    %c0_109 = arith.constant 0 : index
    %c0_110 = arith.constant 0 : index
    %113 = vector.load %arg12[%c0_108, %c0_109, %c0_110] : memref<10x10x8xf32, #tpu.memory_space<vmem>>, vector<8x8x8xf32>
    %114 = vector.shape_cast %113 : vector<8x8x8xf32> to vector<64x8xf32>
    %c0_111 = arith.constant 0 : index
    %c1_112 = arith.constant 1 : index
    %c0_113 = arith.constant 0 : index
    %115 = vector.load %arg12[%c0_111, %c1_112, %c0_113] : memref<10x10x8xf32, #tpu.memory_space<vmem>>, vector<8x8x8xf32>
    %116 = vector.shape_cast %115 : vector<8x8x8xf32> to vector<64x8xf32>
    %c0_114 = arith.constant 0 : index
    %c2_115 = arith.constant 2 : index
    %c0_116 = arith.constant 0 : index
    %117 = vector.load %arg12[%c0_114, %c2_115, %c0_116] : memref<10x10x8xf32, #tpu.memory_space<vmem>>, vector<8x8x8xf32>
    %118 = vector.shape_cast %117 : vector<8x8x8xf32> to vector<64x8xf32>
    %c1_117 = arith.constant 1 : index
    %c0_118 = arith.constant 0 : index
    %c0_119 = arith.constant 0 : index
    %119 = vector.load %arg12[%c1_117, %c0_118, %c0_119] : memref<10x10x8xf32, #tpu.memory_space<vmem>>, vector<8x8x8xf32>
    %120 = vector.shape_cast %119 : vector<8x8x8xf32> to vector<64x8xf32>
    %c1_120 = arith.constant 1 : index
    %c1_121 = arith.constant 1 : index
    %c0_122 = arith.constant 0 : index
    %121 = vector.load %arg12[%c1_120, %c1_121, %c0_122] : memref<10x10x8xf32, #tpu.memory_space<vmem>>, vector<8x8x8xf32>
    %122 = vector.shape_cast %121 : vector<8x8x8xf32> to vector<64x8xf32>
    %c1_123 = arith.constant 1 : index
    %c2_124 = arith.constant 2 : index
    %c0_125 = arith.constant 0 : index
    %123 = vector.load %arg12[%c1_123, %c2_124, %c0_125] : memref<10x10x8xf32, #tpu.memory_space<vmem>>, vector<8x8x8xf32>
    %124 = vector.shape_cast %123 : vector<8x8x8xf32> to vector<64x8xf32>
    %c2_126 = arith.constant 2 : index
    %c0_127 = arith.constant 0 : index
    %c0_128 = arith.constant 0 : index
    %125 = vector.load %arg12[%c2_126, %c0_127, %c0_128] : memref<10x10x8xf32, #tpu.memory_space<vmem>>, vector<8x8x8xf32>
    %126 = vector.shape_cast %125 : vector<8x8x8xf32> to vector<64x8xf32>
    %c2_129 = arith.constant 2 : index
    %c1_130 = arith.constant 1 : index
    %c0_131 = arith.constant 0 : index
    %127 = vector.load %arg12[%c2_129, %c1_130, %c0_131] : memref<10x10x8xf32, #tpu.memory_space<vmem>>, vector<8x8x8xf32>
    %128 = vector.shape_cast %127 : vector<8x8x8xf32> to vector<64x8xf32>
    %c2_132 = arith.constant 2 : index
    %c2_133 = arith.constant 2 : index
    %c0_134 = arith.constant 0 : index
    %129 = vector.load %arg12[%c2_132, %c2_133, %c0_134] : memref<10x10x8xf32, #tpu.memory_space<vmem>>, vector<8x8x8xf32>
    %130 = vector.shape_cast %129 : vector<8x8x8xf32> to vector<64x8xf32>
    %131 = tpu.concatenate %114, %116, %118, %120, %122, %124, %126, %128, %130 in 1 : vector<64x8xf32>, vector<64x8xf32>, vector<64x8xf32>, vector<64x8xf32>, vector<64x8xf32>, vector<64x8xf32>, vector<64x8xf32>, vector<64x8xf32>, vector<64x8xf32> -> vector<64x72xf32>
    %132 = arith.truncf %131 : vector<64x72xf32> to vector<64x72xbf16>
    %c0_135 = arith.constant 0 : index
    %c0_136 = arith.constant 0 : index
    %133 = vector.load %arg6[%c0_135, %c0_136] : memref<72x8xbf16, #tpu.memory_space<vmem>>, vector<72x8xbf16>
    %cst_137 = arith.constant dense<0.000000e+00> : vector<64x8xf32>
    %134 = tpu.matmul %132, %133, %cst_137 {dimension_numbers = #tpu.dot_dimension_numbers<[1], [0], [0], [1], [0, 0, 1, 1], [], []>} : vector<64x72xbf16>, vector<72x8xbf16>, vector<64x8xf32> -> vector<64x8xf32>
    %c0_138 = arith.constant 0 : index
    %c0_139 = arith.constant 0 : index
    %135 = vector.load %arg7[%c0_138, %c0_139] : memref<1x8xf32, #tpu.memory_space<vmem>>, vector<1x8xf32>
    %136 = vector.broadcast %135 : vector<1x8xf32> to vector<64x8xf32>
    %137 = arith.addf %134, %136 : vector<64x8xf32>
    %c0_140 = arith.constant 0 : index
    %c0_141 = arith.constant 0 : index
    %c0_142 = arith.constant 0 : index
    %138 = vector.load %arg10[%c0_140, %c0_141, %c0_142] : memref<2x64x8xf32, #tpu.memory_space<vmem>>, vector<1x64x8xf32>
    %139 = vector.shape_cast %138 : vector<1x64x8xf32> to vector<64x8xf32>
    %140 = vector.shape_cast %137 : vector<64x8xf32> to vector<1x64x8xf32>
    tpu.vector_store %arg10[%c0_140, %c0_141, %c0_142], %140 {strides = array<i32>} : memref<2x64x8xf32, #tpu.memory_space<vmem>>, vector<1x64x8xf32>,
    %c1_143 = arith.constant 1 : index
    %c0_144 = arith.constant 0 : index
    %c0_145 = arith.constant 0 : index
    %141 = vector.load %arg13[%c1_143, %c0_144, %c0_145] : memref<2x64x8xf32, #tpu.memory_space<vmem>>, vector<1x64x8xf32>
    %142 = vector.shape_cast %141 : vector<1x64x8xf32> to vector<64x8xf32>
    %143 = vector.broadcast %99 : vector<1x8xf32> to vector<64x8xf32>
    %144 = arith.mulf %142, %143 : vector<64x8xf32>
    %145 = vector.broadcast %102 : vector<1x8xf32> to vector<64x8xf32>
    %146 = arith.addf %144, %145 : vector<64x8xf32>
    %cst_146 = arith.constant 0.000000e+00 : f32
    %147 = vector.broadcast %cst_146 : f32 to vector<64x8xf32>
    %148 = arith.maximumf %146, %147 : vector<64x8xf32>
    %149 = vector.shape_cast %148 : vector<64x8xf32> to vector<8x8x8xf32>
    %c1_147 = arith.constant 1 : index
    %c1_148 = arith.constant 1 : index
    %c0_149 = arith.constant 0 : index
    %150 = vector.load %arg12[%c1_147, %c1_148, %c0_149] : memref<10x10x8xf32, #tpu.memory_space<vmem>>, vector<8x8x8xf32>
    tpu.vector_store %arg12[%c1_147, %c1_148, %c0_149], %149 {strides = array<i32>} : memref<10x10x8xf32, #tpu.memory_space<vmem>>, vector<8x8x8xf32>,
    %c0_150 = arith.constant 0 : index
    %c0_151 = arith.constant 0 : index
    %c0_152 = arith.constant 0 : index
    %151 = vector.load %arg12[%c0_150, %c0_151, %c0_152] : memref<10x10x8xf32, #tpu.memory_space<vmem>>, vector<8x8x8xf32>
    %152 = vector.shape_cast %151 : vector<8x8x8xf32> to vector<64x8xf32>
    %c0_153 = arith.constant 0 : index
    %c1_154 = arith.constant 1 : index
    %c0_155 = arith.constant 0 : index
    %153 = vector.load %arg12[%c0_153, %c1_154, %c0_155] : memref<10x10x8xf32, #tpu.memory_space<vmem>>, vector<8x8x8xf32>
    %154 = vector.shape_cast %153 : vector<8x8x8xf32> to vector<64x8xf32>
    %c0_156 = arith.constant 0 : index
    %c2_157 = arith.constant 2 : index
    %c0_158 = arith.constant 0 : index
    %155 = vector.load %arg12[%c0_156, %c2_157, %c0_158] : memref<10x10x8xf32, #tpu.memory_space<vmem>>, vector<8x8x8xf32>
    %156 = vector.shape_cast %155 : vector<8x8x8xf32> to vector<64x8xf32>
    %c1_159 = arith.constant 1 : index
    %c0_160 = arith.constant 0 : index
    %c0_161 = arith.constant 0 : index
    %157 = vector.load %arg12[%c1_159, %c0_160, %c0_161] : memref<10x10x8xf32, #tpu.memory_space<vmem>>, vector<8x8x8xf32>
    %158 = vector.shape_cast %157 : vector<8x8x8xf32> to vector<64x8xf32>
    %c1_162 = arith.constant 1 : index
    %c1_163 = arith.constant 1 : index
    %c0_164 = arith.constant 0 : index
    %159 = vector.load %arg12[%c1_162, %c1_163, %c0_164] : memref<10x10x8xf32, #tpu.memory_space<vmem>>, vector<8x8x8xf32>
    %160 = vector.shape_cast %159 : vector<8x8x8xf32> to vector<64x8xf32>
    %c1_165 = arith.constant 1 : index
    %c2_166 = arith.constant 2 : index
    %c0_167 = arith.constant 0 : index
    %161 = vector.load %arg12[%c1_165, %c2_166, %c0_167] : memref<10x10x8xf32, #tpu.memory_space<vmem>>, vector<8x8x8xf32>
    %162 = vector.shape_cast %161 : vector<8x8x8xf32> to vector<64x8xf32>
    %c2_168 = arith.constant 2 : index
    %c0_169 = arith.constant 0 : index
    %c0_170 = arith.constant 0 : index
    %163 = vector.load %arg12[%c2_168, %c0_169, %c0_170] : memref<10x10x8xf32, #tpu.memory_space<vmem>>, vector<8x8x8xf32>
    %164 = vector.shape_cast %163 : vector<8x8x8xf32> to vector<64x8xf32>
    %c2_171 = arith.constant 2 : index
    %c1_172 = arith.constant 1 : index
    %c0_173 = arith.constant 0 : index
    %165 = vector.load %arg12[%c2_171, %c1_172, %c0_173] : memref<10x10x8xf32, #tpu.memory_space<vmem>>, vector<8x8x8xf32>
    %166 = vector.shape_cast %165 : vector<8x8x8xf32> to vector<64x8xf32>
    %c2_174 = arith.constant 2 : index
    %c2_175 = arith.constant 2 : index
    %c0_176 = arith.constant 0 : index
    %167 = vector.load %arg12[%c2_174, %c2_175, %c0_176] : memref<10x10x8xf32, #tpu.memory_space<vmem>>, vector<8x8x8xf32>
    %168 = vector.shape_cast %167 : vector<8x8x8xf32> to vector<64x8xf32>
    %169 = tpu.concatenate %152, %154, %156, %158, %160, %162, %164, %166, %168 in 1 : vector<64x8xf32>, vector<64x8xf32>, vector<64x8xf32>, vector<64x8xf32>, vector<64x8xf32>, vector<64x8xf32>, vector<64x8xf32>, vector<64x8xf32>, vector<64x8xf32> -> vector<64x72xf32>
    %170 = arith.truncf %169 : vector<64x72xf32> to vector<64x72xbf16>
    %c0_177 = arith.constant 0 : index
    %c0_178 = arith.constant 0 : index
    %171 = vector.load %arg6[%c0_177, %c0_178] : memref<72x8xbf16, #tpu.memory_space<vmem>>, vector<72x8xbf16>
    %cst_179 = arith.constant dense<0.000000e+00> : vector<64x8xf32>
    %172 = tpu.matmul %170, %171, %cst_179 {dimension_numbers = #tpu.dot_dimension_numbers<[1], [0], [0], [1], [0, 0, 1, 1], [], []>} : vector<64x72xbf16>, vector<72x8xbf16>, vector<64x8xf32> -> vector<64x8xf32>
    %c0_180 = arith.constant 0 : index
    %c0_181 = arith.constant 0 : index
    %173 = vector.load %arg7[%c0_180, %c0_181] : memref<1x8xf32, #tpu.memory_space<vmem>>, vector<1x8xf32>
    %174 = vector.broadcast %173 : vector<1x8xf32> to vector<64x8xf32>
    %175 = arith.addf %172, %174 : vector<64x8xf32>
    %c1_182 = arith.constant 1 : index
    %c0_183 = arith.constant 0 : index
    %c0_184 = arith.constant 0 : index
    %176 = vector.load %arg10[%c1_182, %c0_183, %c0_184] : memref<2x64x8xf32, #tpu.memory_space<vmem>>, vector<1x64x8xf32>
    %177 = vector.shape_cast %176 : vector<1x64x8xf32> to vector<64x8xf32>
    %178 = vector.shape_cast %175 : vector<64x8xf32> to vector<1x64x8xf32>
    tpu.vector_store %arg10[%c1_182, %c0_183, %c0_184], %178 {strides = array<i32>} : memref<2x64x8xf32, #tpu.memory_space<vmem>>, vector<1x64x8xf32>,
    %c0_185 = arith.constant 0 : index
    %c0_186 = arith.constant 0 : index
    %c0_187 = arith.constant 0 : index
    %179 = vector.load %arg10[%c0_185, %c0_186, %c0_187] : memref<2x64x8xf32, #tpu.memory_space<vmem>>, vector<2x64x8xf32>
    %180 = vector.shape_cast %179 : vector<2x64x8xf32> to vector<128x8xf32>
    %cst_188 = arith.constant dense<0.000000e+00> : vector<8xf32>
    %181 = vector.multi_reduction <add>, %180, %cst_188 [0] : vector<128x8xf32> to vector<8xf32>
    %182 = vector.shape_cast %181 : vector<8xf32> to vector<1x8xf32>
    %183 = arith.mulf %180, %180 : vector<128x8xf32>
    %cst_189 = arith.constant dense<0.000000e+00> : vector<8xf32>
    %184 = vector.multi_reduction <add>, %183, %cst_189 [0] : vector<128x8xf32> to vector<8xf32>
    %185 = vector.shape_cast %184 : vector<8xf32> to vector<1x8xf32>
    %cst_190 = arith.constant 1.280000e+02 : f32
    %186 = vector.broadcast %cst_190 : f32 to vector<1x8xf32>
    %187 = arith.divf %182, %186 : vector<1x8xf32>
    %cst_191 = arith.constant 1.280000e+02 : f32
    %188 = vector.broadcast %cst_191 : f32 to vector<1x8xf32>
    %189 = arith.divf %185, %188 : vector<1x8xf32>
    %190 = arith.mulf %187, %187 : vector<1x8xf32>
    %191 = arith.subf %189, %190 : vector<1x8xf32>
    %cst_192 = arith.constant 0.000000e+00 : f32
    %192 = vector.broadcast %cst_192 : f32 to vector<1x8xf32>
    %193 = arith.maximumf %191, %192 : vector<1x8xf32>
    %c0_193 = arith.constant 0 : index
    %c0_194 = arith.constant 0 : index
    %194 = vector.load %arg8[%c0_193, %c0_194] : memref<1x8xf32, #tpu.memory_space<vmem>>, vector<1x8xf32>
    %cst_195 = arith.constant 9.99999974E-6 : f32
    %195 = vector.broadcast %cst_195 : f32 to vector<1x8xf32>
    %196 = arith.addf %193, %195 : vector<1x8xf32>
    %197 = math.rsqrt %196 : vector<1x8xf32>
    %198 = arith.mulf %194, %197 : vector<1x8xf32>
    %c0_196 = arith.constant 0 : index
    %c0_197 = arith.constant 0 : index
    %199 = vector.load %arg9[%c0_196, %c0_197] : memref<1x8xf32, #tpu.memory_space<vmem>>, vector<1x8xf32>
    %200 = arith.mulf %187, %198 : vector<1x8xf32>
    %201 = arith.subf %199, %200 : vector<1x8xf32>
    %c0_198 = arith.constant 0 : index
    %c0_199 = arith.constant 0 : index
    %c0_200 = arith.constant 0 : index
    %202 = vector.load %arg10[%c0_198, %c0_199, %c0_200] : memref<2x64x8xf32, #tpu.memory_space<vmem>>, vector<2x64x8xf32>
    %203 = vector.shape_cast %198 : vector<1x8xf32> to vector<1x1x8xf32>
    %204 = vector.broadcast %203 : vector<1x1x8xf32> to vector<2x64x8xf32>
    %205 = arith.mulf %202, %204 : vector<2x64x8xf32>
    %206 = vector.shape_cast %201 : vector<1x8xf32> to vector<1x1x8xf32>
    %207 = vector.broadcast %206 : vector<1x1x8xf32> to vector<2x64x8xf32>
    %208 = arith.addf %205, %207 : vector<2x64x8xf32>
    %cst_201 = arith.constant 0.000000e+00 : f32
    %209 = vector.broadcast %cst_201 : f32 to vector<2x64x8xf32>
    %210 = arith.maximumf %208, %209 : vector<2x64x8xf32>
    %c0_202 = arith.constant 0 : index
    %c0_203 = arith.constant 0 : index
    %c0_204 = arith.constant 0 : index
    %211 = vector.load %arg10[%c0_202, %c0_203, %c0_204] : memref<2x64x8xf32, #tpu.memory_space<vmem>>, vector<2x64x8xf32>
    tpu.vector_store %arg10[%c0_202, %c0_203, %c0_204], %210 {strides = array<i32>} : memref<2x64x8xf32, #tpu.memory_space<vmem>>, vector<2x64x8xf32>,
    return
  }
  func.func @transform_0(%arg0: i32) -> (i32, i32, i32, i32) {
    %c0_i32 = arith.constant 0 : i32
    %c0_i32_0 = arith.constant 0 : i32
    %c0_i32_1 = arith.constant 0 : i32
    %c0_i32_2 = arith.constant 0 : i32
    %c0_i32_3 = arith.constant 0 : i32
    return %c0_i32, %c0_i32_0, %c0_i32_1, %c0_i32_2 : i32, i32, i32, i32
  }
  func.func @transform_1(%arg0: i32) -> (i32, i32) {
    %c0_i32 = arith.constant 0 : i32
    %c0_i32_0 = arith.constant 0 : i32
    %c0_i32_1 = arith.constant 0 : i32
    return %c0_i32, %c0_i32_0 : i32, i32
  }
  func.func @transform_2(%arg0: i32) -> (i32, i32) {
    %c0_i32 = arith.constant 0 : i32
    %c0_i32_0 = arith.constant 0 : i32
    %c0_i32_1 = arith.constant 0 : i32
    return %c0_i32, %c0_i32_0 : i32, i32
  }
  func.func @transform_3(%arg0: i32) -> (i32, i32) {
    %c0_i32 = arith.constant 0 : i32
    %c0_i32_0 = arith.constant 0 : i32
    %c0_i32_1 = arith.constant 0 : i32
    return %c0_i32, %c0_i32_0 : i32, i32
  }
  func.func @transform_4(%arg0: i32) -> (i32, i32) {
    %c0_i32 = arith.constant 0 : i32
    %c0_i32_0 = arith.constant 0 : i32
    %c0_i32_1 = arith.constant 0 : i32
    return %c0_i32, %c0_i32_0 : i32, i32
  }
  func.func @transform_5(%arg0: i32) -> (i32, i32) {
    %c0_i32 = arith.constant 0 : i32
    %c0_i32_0 = arith.constant 0 : i32
    %c0_i32_1 = arith.constant 0 : i32
    return %c0_i32, %c0_i32_0 : i32, i32
  }
  func.func @transform_6(%arg0: i32) -> (i32, i32) {
    %c0_i32 = arith.constant 0 : i32
    %c0_i32_0 = arith.constant 0 : i32
    %c0_i32_1 = arith.constant 0 : i32
    return %c0_i32, %c0_i32_0 : i32, i32
  }
  func.func @transform_7(%arg0: i32) -> (i32, i32) {
    %c0_i32 = arith.constant 0 : i32
    %c0_i32_0 = arith.constant 0 : i32
    %c0_i32_1 = arith.constant 0 : i32
    return %c0_i32, %c0_i32_0 : i32, i32
  }
  func.func @transform_8(%arg0: i32) -> (i32, i32) {
    %c0_i32 = arith.constant 0 : i32
    %c0_i32_0 = arith.constant 0 : i32
    %c0_i32_1 = arith.constant 0 : i32
    return %c0_i32, %c0_i32_0 : i32, i32
  }
  func.func @transform_9(%arg0: i32) -> (i32, i32, i32) {
    %c0_i32 = arith.constant 0 : i32
    %c0_i32_0 = arith.constant 0 : i32
    %c0_i32_1 = arith.constant 0 : i32
    %c0_i32_2 = arith.constant 0 : i32
    return %c0_i32, %c0_i32_0, %c0_i32_1 : i32, i32, i32
  }
}

</mosaic_0001>

<llo_original>
// kernel: overlap_patch_embed_forward.1
$region0: #{overlap_patch_embed_forward.1}
  #allocation0 [shape = 'u32[]', space=smem, size = 0x4, offset = 0x4, fixed_abs, tag = 'smem constant byte address 0x4 - core index']
  #allocation1 [shape = 'u32[72,128]{1,0:T(1,128)}', space=vmem, size = 0x9000, scoped, tag = 'internal scratch']
  #allocation2 [shape = 'f32[10,10,4]{2,1,0:T(8,128)}', space=vmem, size = 0x14000, scoped, tag = 'scratch operand']
  #allocation3 [shape = 'f32[10,10,8]{2,1,0:T(8,128)}', space=vmem, size = 0x14000, scoped, tag = 'scratch operand']
  #allocation4 [shape = 'f32[2,64,8]{2,1,0:T(8,128)}', space=vmem, size = 0x10000, scoped, tag = 'scratch operand']
  %s0 = inlined_call_operand.vmem [shape: f32[2,32,8,4], index: 0, kind: input, shape index: {}]
  %s1 = inlined_call_operand.vmem [shape: bf16[36,8], index: 1, kind: input, shape index: {}]
  %s2 = inlined_call_operand.vmem [shape: f32[1,8], index: 2, kind: input, shape index: {}]
  %s3 = inlined_call_operand.vmem [shape: f32[1,8], index: 3, kind: input, shape index: {}]
  %s4 = inlined_call_operand.vmem [shape: f32[1,8], index: 4, kind: input, shape index: {}]
  %s5 = inlined_call_operand.vmem [shape: bf16[72,8], index: 5, kind: input, shape index: {}]
  %s6 = inlined_call_operand.vmem [shape: f32[1,8], index: 6, kind: input, shape index: {}]
  %s7 = inlined_call_operand.vmem [shape: f32[1,8], index: 7, kind: input, shape index: {}]
  %s8 = inlined_call_operand.vmem [shape: f32[1,8], index: 8, kind: input, shape index: {}]
  %s9 = inlined_call_operand.vmem [shape: f32[2,64,8], index: 9, kind: output, shape index: {}]
  %s10 = sld [smem:[#allocation0]]
  $region46: #{overlap_patch_embed_forward.1} parent=0
    _
  %s12 = ssub.s32 1, %s10
  %s13 = scalar_select 0, %s12, %s10
  // Predicated region
  $region2: #{overlap_patch_embed_forward.1} parent=0 // pred_check
    _
  $region3: #{overlap_patch_embed_forward.1} parent=0 // pred_check_branch
    %15 = sbr.rel (0) target = $region5
  $region4: #{overlap_patch_embed_forward.1} parent=0 // pred_region
    _
  $region5: #{overlap_patch_embed_forward.1} parent=0 // pred_fallthru
    _
  // Predicated region
  $region6: #{overlap_patch_embed_forward.1} parent=0 // pred_check
    _
  $region7: #{overlap_patch_embed_forward.1} parent=0 // pred_check_branch
    %17 = sbr.rel (0) target = $region9
  $region8: #{overlap_patch_embed_forward.1} parent=0 // pred_region
    _
  $region9: #{overlap_patch_embed_forward.1} parent=0 // pred_fallthru
    _
  // Predicated region
  $region10: #{overlap_patch_embed_forward.1} parent=0 // pred_check
    _
  $region11: #{overlap_patch_embed_forward.1} parent=0 // pred_check_branch
    %19 = sbr.rel (0) target = $region13
  $region12: #{overlap_patch_embed_forward.1} parent=0 // pred_region
    _
  $region13: #{overlap_patch_embed_forward.1} parent=0 // pred_fallthru
    _
  // Predicated region
  $region14: #{overlap_patch_embed_forward.1} parent=0 // pred_check
    _
  $region15: #{overlap_patch_embed_forward.1} parent=0 // pred_check_branch
    %21 = sbr.rel (0) target = $region17
  $region16: #{overlap_patch_embed_forward.1} parent=0 // pred_region
    _
  $region17: #{overlap_patch_embed_forward.1} parent=0 // pred_fallthru
    _
  // Predicated region
  $region18: #{overlap_patch_embed_forward.1} parent=0 // pred_check
    _
  $region19: #{overlap_patch_embed_forward.1} parent=0 // pred_check_branch
    %23 = sbr.rel (0) target = $region21
  $region20: #{overlap_patch_embed_forward.1} parent=0 // pred_region
    _
  $region21: #{overlap_patch_embed_forward.1} parent=0 // pred_fallthru
    _
  // Predicated region
  $region22: #{overlap_patch_embed_forward.1} parent=0 // pred_check
    _
  $region23: #{overlap_patch_embed_forward.1} parent=0 // pred_check_branch
    %25 = sbr.rel (0) target = $region25
  $region24: #{overlap_patch_embed_forward.1} parent=0 // pred_region
    _
  $region25: #{overlap_patch_embed_forward.1} parent=0 // pred_fallthru
    _
  // Predicated region
  $region26: #{overlap_patch_embed_forward.1} parent=0 // pred_check
    _
  $region27: #{overlap_patch_embed_forward.1} parent=0 // pred_check_branch
    %27 = sbr.rel (0) target = $region29
  $region28: #{overlap_patch_embed_forward.1} parent=0 // pred_region
    _
  $region29: #{overlap_patch_embed_forward.1} parent=0 // pred_fallthru
    _
  // Predicated region
  $region30: #{overlap_patch_embed_forward.1} parent=0 // pred_check
    _
  $region31: #{overlap_patch_embed_forward.1} parent=0 // pred_check_branch
    %29 = sbr.rel (0) target = $region33
  $region32: #{overlap_patch_embed_forward.1} parent=0 // pred_region
    _
  $region33: #{overlap_patch_embed_forward.1} parent=0 // pred_fallthru
    _
  // Predicated region
  $region34: #{overlap_patch_embed_forward.1} parent=0 // pred_check
    _
  $region35: #{overlap_patch_embed_forward.1} parent=0 // pred_check_branch
    %31 = sbr.rel (0) target = $region37
  $region36: #{overlap_patch_embed_forward.1} parent=0 // pred_region
    _
  $region37: #{overlap_patch_embed_forward.1} parent=0 // pred_fallthru
    _
  %vm33 = vcmask 31744
  %34 = vst.msk [vmem:[#allocation2] sm:$0xff] %vm33, 0.0
  %vm35 = vcmask 25600
  %36 = vst.msk [vmem:[#allocation2 + $0x8] sm:$0x3] %vm35, 0.0
  %37 = vst.msk [vmem:[#allocation2 + $0x10] sm:$0xff] %vm33, 0.0
  %38 = vst.msk [vmem:[#allocation2 + $0x18] sm:$0x3] %vm35, 0.0
  %39 = vst.msk [vmem:[#allocation2 + $0x20] sm:$0xff] %vm33, 0.0
  %40 = vst.msk [vmem:[#allocation2 + $0x28] sm:$0x3] %vm35, 0.0
  %41 = vst.msk [vmem:[#allocation2 + $0x30] sm:$0xff] %vm33, 0.0
  %42 = vst.msk [vmem:[#allocation2 + $0x38] sm:$0x3] %vm35, 0.0
  %43 = vst.msk [vmem:[#allocation2 + $0x40] sm:$0xff] %vm33, 0.0
  %44 = vst.msk [vmem:[#allocation2 + $0x48] sm:$0x3] %vm35, 0.0
  %45 = vst.msk [vmem:[#allocation2 + $0x50] sm:$0xff] %vm33, 0.0
  %46 = vst.msk [vmem:[#allocation2 + $0x58] sm:$0x3] %vm35, 0.0
  %47 = vst.msk [vmem:[#allocation2 + $0x60] sm:$0xff] %vm33, 0.0
  %48 = vst.msk [vmem:[#allocation2 + $0x68] sm:$0x3] %vm35, 0.0
  %49 = vst.msk [vmem:[#allocation2 + $0x70] sm:$0xff] %vm33, 0.0
  %50 = vst.msk [vmem:[#allocation2 + $0x78] sm:$0x3] %vm35, 0.0
  %51 = vst.msk [vmem:[#allocation2 + $0x80] sm:$0xff] %vm33, 0.0
  %52 = vst.msk [vmem:[#allocation2 + $0x88] sm:$0x3] %vm35, 0.0
  %53 = vst.msk [vmem:[#allocation2 + $0x90] sm:$0xff] %vm33, 0.0
  %54 = vst.msk [vmem:[#allocation2 + $0x98] sm:$0x3] %vm35, 0.0
  %vm55 = vcmask 64512
  %56 = vst.msk [vmem:[#allocation3] sm:$0xff] %vm55, 0.0
  %vm57 = vcmask 58368
  %58 = vst.msk [vmem:[#allocation3 + $0x8] sm:$0x3] %vm57, 0.0
  %59 = vst.msk [vmem:[#allocation3 + $0x10] sm:$0xff] %vm55, 0.0
  %60 = vst.msk [vmem:[#allocation3 + $0x18] sm:$0x3] %vm57, 0.0
  %61 = vst.msk [vmem:[#allocation3 + $0x20] sm:$0xff] %vm55, 0.0
  %62 = vst.msk [vmem:[#allocation3 + $0x28] sm:$0x3] %vm57, 0.0
  %63 = vst.msk [vmem:[#allocation3 + $0x30] sm:$0xff] %vm55, 0.0
  %64 = vst.msk [vmem:[#allocation3 + $0x38] sm:$0x3] %vm57, 0.0
  %65 = vst.msk [vmem:[#allocation3 + $0x40] sm:$0xff] %vm55, 0.0
  %66 = vst.msk [vmem:[#allocation3 + $0x48] sm:$0x3] %vm57, 0.0
  %67 = vst.msk [vmem:[#allocation3 + $0x50] sm:$0xff] %vm55, 0.0
  %68 = vst.msk [vmem:[#allocation3 + $0x58] sm:$0x3] %vm57, 0.0
  %69 = vst.msk [vmem:[#allocation3 + $0x60] sm:$0xff] %vm55, 0.0
  %70 = vst.msk [vmem:[#allocation3 + $0x68] sm:$0x3] %vm57, 0.0
  %71 = vst.msk [vmem:[#allocation3 + $0x70] sm:$0xff] %vm55, 0.0
  %72 = vst.msk [vmem:[#allocation3 + $0x78] sm:$0x3] %vm57, 0.0
  %73 = vst.msk [vmem:[#allocation3 + $0x80] sm:$0xff] %vm55, 0.0
  %74 = vst.msk [vmem:[#allocation3 + $0x88] sm:$0x3] %vm57, 0.0
  %75 = vst.msk [vmem:[#allocation3 + $0x90] sm:$0xff] %vm55, 0.0
  %76 = vst.msk [vmem:[#allocation3 + $0x98] sm:$0x3] %vm57, 0.0
  %v77 = vld [vmem:[%s0] sm:$0xff]
  %v78 = vld [vmem:[%s0 + $0x8] sm:$0xff]
  %v79 = vld [vmem:[%s0 + $0x10] sm:$0xff]
  %v80 = vld [vmem:[%s0 + $0x18] sm:$0xff]
  %v81 = vld [vmem:[%s0 + $0x20] sm:$0xff]
  %v82 = vld [vmem:[%s0 + $0x28] sm:$0xff]
  %v83 = vld [vmem:[%s0 + $0x30] sm:$0xff]
  %v84 = vld [vmem:[%s0 + $0x38] sm:$0xff]
  %v85 = vld [vmem:[%s0 + $0x40] sm:$0xff]
  %v86 = vld [vmem:[%s0 + $0x48] sm:$0xff]
  %v87 = vld [vmem:[%s0 + $0x50] sm:$0xff]
  %v88 = vld [vmem:[%s0 + $0x58] sm:$0xff]
  %v89 = vld [vmem:[%s0 + $0x60] sm:$0xff]
  %v90 = vld [vmem:[%s0 + $0x68] sm:$0xff]
  %v91 = vld [vmem:[%s0 + $0x70] sm:$0xff]
  %v92 = vld [vmem:[%s0 + $0x78] sm:$0xff]
  %v93 = vld [vmem:[%s0 + $0x80] sm:$0xff]
  %v94 = vld [vmem:[%s0 + $0x88] sm:$0xff]
  %v95 = vld [vmem:[%s0 + $0x90] sm:$0xff]
  %v96 = vld [vmem:[%s0 + $0x98] sm:$0xff]
  %v97 = vld [vmem:[%s0 + $0xa0] sm:$0xff]
  %v98 = vld [vmem:[%s0 + $0xa8] sm:$0xff]
  %v99 = vld [vmem:[%s0 + $0xb0] sm:$0xff]
  %v100 = vld [vmem:[%s0 + $0xb8] sm:$0xff]
  %v101 = vld [vmem:[%s0 + $0xc0] sm:$0xff]
  %v102 = vld [vmem:[%s0 + $0xc8] sm:$0xff]
  %v103 = vld [vmem:[%s0 + $0xd0] sm:$0xff]
  %v104 = vld [vmem:[%s0 + $0xd8] sm:$0xff]
  %v105 = vld [vmem:[%s0 + $0xe0] sm:$0xff]
  %v106 = vld [vmem:[%s0 + $0xe8] sm:$0xff]
  %v107 = vld [vmem:[%s0 + $0xf0] sm:$0xff]
  %v108 = vld [vmem:[%s0 + $0xf8] sm:$0xff]
  %v109 = vmax.f32 %v77, %v85
  %v110 = vmax.f32 %v78, %v86
  %v111 = vmax.f32 %v79, %v87
  %v112 = vmax.f32 %v80, %v88
  %v113 = vmax.f32 %v81, %v89
  %v114 = vmax.f32 %v82, %v90
  %v115 = vmax.f32 %v83, %v91
  %v116 = vmax.f32 %v84, %v92
  %v117 = vmax.f32 %v93, %v101
  %v118 = vmax.f32 %v94, %v102
  %v119 = vmax.f32 %v95, %v103
  %v120 = vmax.f32 %v96, %v104
  %v121 = vmax.f32 %v97, %v105
  %v122 = vmax.f32 %v98, %v106
  %v123 = vmax.f32 %v99, %v107
  %v124 = vmax.f32 %v100, %v108
  %v125 = vmax.f32 %v109, %v117
  %v126 = vmax.f32 %v110, %v118
  %v127 = vmax.f32 %v111, %v119
  %v128 = vmax.f32 %v112, %v120
  %v129 = vmax.f32 %v113, %v121
  %v130 = vmax.f32 %v114, %v122
  %v131 = vmax.f32 %v115, %v123
  %v132 = vmax.f32 %v116, %v124
  %s133 = scalar_lea.vmem [#allocation2], 16
  %134 = vst.msk [vmem:[%s133 + $0x1] sm:$0xff] %vm33, %v125
  %135 = vst.msk [vmem:[%s133 + $0x11] sm:$0xff] %vm33, %v126
  %136 = vst.msk [vmem:[%s133 + $0x21] sm:$0xff] %vm33, %v127
  %137 = vst.msk [vmem:[%s133 + $0x31] sm:$0xff] %vm33, %v128
  %138 = vst.msk [vmem:[%s133 + $0x41] sm:$0xff] %vm33, %v129
  %139 = vst.msk [vmem:[%s133 + $0x51] sm:$0xff] %vm33, %v130
  %140 = vst.msk [vmem:[%s133 + $0x61] sm:$0xff] %vm33, %v131
  %141 = vst.msk [vmem:[%s133 + $0x71] sm:$0xff] %vm33, %v132
  %v142 = vld [vmem:[#allocation2] sm:$0xff]
  %v143 = vld [vmem:[#allocation2 + $0x10] sm:$0xff]
  %v144 = vld [vmem:[#allocation2 + $0x20] sm:$0xff]
  %v145 = vld [vmem:[#allocation2 + $0x30] sm:$0xff]
  %v146 = vld [vmem:[#allocation2 + $0x40] sm:$0xff]
  %v147 = vld [vmem:[#allocation2 + $0x50] sm:$0xff]
  %v148 = vld [vmem:[#allocation2 + $0x60] sm:$0xff]
  %v149 = vld [vmem:[#allocation2 + $0x70] sm:$0xff]
  %v150 = vld [vmem:[#allocation2 + $0x1] sm:$0xff]
  %v151 = vld [vmem:[#allocation2 + $0x11] sm:$0xff]
  %v152 = vld [vmem:[#allocation2 + $0x21] sm:$0xff]
  %v153 = vld [vmem:[#allocation2 + $0x31] sm:$0xff]
  %v154 = vld [vmem:[#allocation2 + $0x41] sm:$0xff]
  %v155 = vld [vmem:[#allocation2 + $0x51] sm:$0xff]
  %v156 = vld [vmem:[#allocation2 + $0x61] sm:$0xff]
  %v157 = vld [vmem:[#allocation2 + $0x71] sm:$0xff]
  %v158 = vld [vmem:[#allocation2 + $0x2] sm:$0xff]
  %v159 = vld [vmem:[#allocation2 + $0x12] sm:$0xff]
  %v160 = vld [vmem:[#allocation2 + $0x22] sm:$0xff]
  %v161 = vld [vmem:[#allocation2 + $0x32] sm:$0xff]
  %v162 = vld [vmem:[#allocation2 + $0x42] sm:$0xff]
  %v163 = vld [vmem:[#allocation2 + $0x52] sm:$0xff]
  %v164 = vld [vmem:[#allocation2 + $0x62] sm:$0xff]
  %v165 = vld [vmem:[#allocation2 + $0x72] sm:$0xff]
  %v166 = vld [vmem:[%s133] sm:$0xff]
  %v167 = vld [vmem:[%s133 + $0x10] sm:$0xff]
  %v168 = vld [vmem:[%s133 + $0x20] sm:$0xff]
  %v169 = vld [vmem:[%s133 + $0x30] sm:$0xff]
  %v170 = vld [vmem:[%s133 + $0x40] sm:$0xff]
  %v171 = vld [vmem:[%s133 + $0x50] sm:$0xff]
  %v172 = vld [vmem:[%s133 + $0x60] sm:$0xff]
  %v173 = vld [vmem:[%s133 + $0x70] sm:$0xff]
  %v174 = vld [vmem:[%s133 + $0x1] sm:$0xff]
  %v175 = vld [vmem:[%s133 + $0x11] sm:$0xff]
  %v176 = vld [vmem:[%s133 + $0x21] sm:$0xff]
  %v177 = vld [vmem:[%s133 + $0x31] sm:$0xff]
  %v178 = vld [vmem:[%s133 + $0x41] sm:$0xff]
  %v179 = vld [vmem:[%s133 + $0x51] sm:$0xff]
  %v180 = vld [vmem:[%s133 + $0x61] sm:$0xff]
  %v181 = vld [vmem:[%s133 + $0x71] sm:$0xff]
  %v182 = vld [vmem:[%s133 + $0x2] sm:$0xff]
  %v183 = vld [vmem:[%s133 + $0x12] sm:$0xff]
  %v184 = vld [vmem:[%s133 + $0x22] sm:$0xff]
  %v185 = vld [vmem:[%s133 + $0x32] sm:$0xff]
  %v186 = vld [vmem:[%s133 + $0x42] sm:$0xff]
  %v187 = vld [vmem:[%s133 + $0x52] sm:$0xff]
  %v188 = vld [vmem:[%s133 + $0x62] sm:$0xff]
  %v189 = vld [vmem:[%s133 + $0x72] sm:$0xff]
  %s190 = scalar_lea.vmem [#allocation2], 32
  %v191 = vld [vmem:[%s190] sm:$0xff]
  %v192 = vld [vmem:[%s190 + $0x10] sm:$0xff]
  %v193 = vld [vmem:[%s190 + $0x20] sm:$0xff]
  %v194 = vld [vmem:[%s190 + $0x30] sm:$0xff]
  %v195 = vld [vmem:[%s190 + $0x40] sm:$0xff]
  %v196 = vld [vmem:[%s190 + $0x50] sm:$0xff]
  %v197 = vld [vmem:[%s190 + $0x60] sm:$0xff]
  %v198 = vld [vmem:[%s190 + $0x70] sm:$0xff]
  %v199 = vld [vmem:[%s190 + $0x1] sm:$0xff]
  %v200 = vld [vmem:[%s190 + $0x11] sm:$0xff]
  %v201 = vld [vmem:[%s190 + $0x21] sm:$0xff]
  %v202 = vld [vmem:[%s190 + $0x31] sm:$0xff]
  %v203 = vld [vmem:[%s190 + $0x41] sm:$0xff]
  %v204 = vld [vmem:[%s190 + $0x51] sm:$0xff]
  %v205 = vld [vmem:[%s190 + $0x61] sm:$0xff]
  %v206 = vld [vmem:[%s190 + $0x71] sm:$0xff]
  %v207 = vld [vmem:[%s190 + $0x2] sm:$0xff]
  %v208 = vld [vmem:[%s190 + $0x12] sm:$0xff]
  %v209 = vld [vmem:[%s190 + $0x22] sm:$0xff]
  %v210 = vld [vmem:[%s190 + $0x32] sm:$0xff]
  %v211 = vld [vmem:[%s190 + $0x42] sm:$0xff]
  %v212 = vld [vmem:[%s190 + $0x52] sm:$0xff]
  %v213 = vld [vmem:[%s190 + $0x62] sm:$0xff]
  %v214 = vld [vmem:[%s190 + $0x72] sm:$0xff]
  %223 = vrot.lane.b32.xlu0 %v150, 4
  %v224 = vpop.permute.xlu0 %223
  %225 = vrot.lane.b32.xlu0 %v151, 4
  %v226 = vpop.permute.xlu0 %225
  %227 = vrot.lane.b32.xlu0 %v152, 4
  %v228 = vpop.permute.xlu0 %227
  %229 = vrot.lane.b32.xlu0 %v153, 4
  %v230 = vpop.permute.xlu0 %229
  %231 = vrot.lane.b32.xlu0 %v154, 4
  %v232 = vpop.permute.xlu0 %231
  %233 = vrot.lane.b32.xlu0 %v155, 4
  %v234 = vpop.permute.xlu0 %233
  %235 = vrot.lane.b32.xlu0 %v156, 4
  %v236 = vpop.permute.xlu0 %235
  %237 = vrot.lane.b32.xlu0 %v157, 4
  %v238 = vpop.permute.xlu0 %237
  %255 = vrot.lane.b32.xlu0 %v158, 8
  %v256 = vpop.permute.xlu0 %255
  %257 = vrot.lane.b32.xlu0 %v159, 8
  %v258 = vpop.permute.xlu0 %257
  %259 = vrot.lane.b32.xlu0 %v160, 8
  %v260 = vpop.permute.xlu0 %259
  %261 = vrot.lane.b32.xlu0 %v161, 8
  %v262 = vpop.permute.xlu0 %261
  %263 = vrot.lane.b32.xlu0 %v162, 8
  %v264 = vpop.permute.xlu0 %263
  %265 = vrot.lane.b32.xlu0 %v163, 8
  %v266 = vpop.permute.xlu0 %265
  %267 = vrot.lane.b32.xlu0 %v164, 8
  %v268 = vpop.permute.xlu0 %267
  %269 = vrot.lane.b32.xlu0 %v165, 8
  %v270 = vpop.permute.xlu0 %269
  %287 = vrot.lane.b32.xlu0 %v166, 12
  %v288 = vpop.permute.xlu0 %287
  %289 = vrot.lane.b32.xlu0 %v167, 12
  %v290 = vpop.permute.xlu0 %289
  %291 = vrot.lane.b32.xlu0 %v168, 12
  %v292 = vpop.permute.xlu0 %291
  %293 = vrot.lane.b32.xlu0 %v169, 12
  %v294 = vpop.permute.xlu0 %293
  %295 = vrot.lane.b32.xlu0 %v170, 12
  %v296 = vpop.permute.xlu0 %295
  %297 = vrot.lane.b32.xlu0 %v171, 12
  %v298 = vpop.permute.xlu0 %297
  %299 = vrot.lane.b32.xlu0 %v172, 12
  %v300 = vpop.permute.xlu0 %299
  %301 = vrot.lane.b32.xlu0 %v173, 12
  %v302 = vpop.permute.xlu0 %301
  %319 = vrot.lane.b32.xlu0 %v174, 16
  %v320 = vpop.permute.xlu0 %319
  %321 = vrot.lane.b32.xlu0 %v175, 16
  %v322 = vpop.permute.xlu0 %321
  %323 = vrot.lane.b32.xlu0 %v176, 16
  %v324 = vpop.permute.xlu0 %323
  %325 = vrot.lane.b32.xlu0 %v177, 16
  %v326 = vpop.permute.xlu0 %325
  %327 = vrot.lane.b32.xlu0 %v178, 16
  %v328 = vpop.permute.xlu0 %327
  %329 = vrot.lane.b32.xlu0 %v179, 16
  %v330 = vpop.permute.xlu0 %329
  %331 = vrot.lane.b32.xlu0 %v180, 16
  %v332 = vpop.permute.xlu0 %331
  %333 = vrot.lane.b32.xlu0 %v181, 16
  %v334 = vpop.permute.xlu0 %333
  %351 = vrot.lane.b32.xlu0 %v182, 20
  %v352 = vpop.permute.xlu0 %351
  %353 = vrot.lane.b32.xlu0 %v183, 20
  %v354 = vpop.permute.xlu0 %353
  %355 = vrot.lane.b32.xlu0 %v184, 20
  %v356 = vpop.permute.xlu0 %355
  %357 = vrot.lane.b32.xlu0 %v185, 20
  %v358 = vpop.permute.xlu0 %357
  %359 = vrot.lane.b32.xlu0 %v186, 20
  %v360 = vpop.permute.xlu0 %359
  %361 = vrot.lane.b32.xlu0 %v187, 20
  %v362 = vpop.permute.xlu0 %361
  %363 = vrot.lane.b32.xlu0 %v188, 20
  %v364 = vpop.permute.xlu0 %363
  %365 = vrot.lane.b32.xlu0 %v189, 20
  %v366 = vpop.permute.xlu0 %365
  %383 = vrot.lane.b32.xlu0 %v191, 24
  %v384 = vpop.permute.xlu0 %383
  %385 = vrot.lane.b32.xlu0 %v192, 24
  %v386 = vpop.permute.xlu0 %385
  %387 = vrot.lane.b32.xlu0 %v193, 24
  %v388 = vpop.permute.xlu0 %387
  %389 = vrot.lane.b32.xlu0 %v194, 24
  %v390 = vpop.permute.xlu0 %389
  %391 = vrot.lane.b32.xlu0 %v195, 24
  %v392 = vpop.permute.xlu0 %391
  %393 = vrot.lane.b32.xlu0 %v196, 24
  %v394 = vpop.permute.xlu0 %393
  %395 = vrot.lane.b32.xlu0 %v197, 24
  %v396 = vpop.permute.xlu0 %395
  %397 = vrot.lane.b32.xlu0 %v198, 24
  %v398 = vpop.permute.xlu0 %397
  %415 = vrot.lane.b32.xlu0 %v199, 28
  %v416 = vpop.permute.xlu0 %415
  %417 = vrot.lane.b32.xlu0 %v200, 28
  %v418 = vpop.permute.xlu0 %417
  %419 = vrot.lane.b32.xlu0 %v201, 28
  %v420 = vpop.permute.xlu0 %419
  %421 = vrot.lane.b32.xlu0 %v202, 28
  %v422 = vpop.permute.xlu0 %421
  %423 = vrot.lane.b32.xlu0 %v203, 28
  %v424 = vpop.permute.xlu0 %423
  %425 = vrot.lane.b32.xlu0 %v204, 28
  %v426 = vpop.permute.xlu0 %425
  %427 = vrot.lane.b32.xlu0 %v205, 28
  %v428 = vpop.permute.xlu0 %427
  %429 = vrot.lane.b32.xlu0 %v206, 28
  %v430 = vpop.permute.xlu0 %429
  %447 = vrot.lane.b32.xlu0 %v207, 32
  %v448 = vpop.permute.xlu0 %447
  %449 = vrot.lane.b32.xlu0 %v208, 32
  %v450 = vpop.permute.xlu0 %449
  %451 = vrot.lane.b32.xlu0 %v209, 32
  %v452 = vpop.permute.xlu0 %451
  %453 = vrot.lane.b32.xlu0 %v210, 32
  %v454 = vpop.permute.xlu0 %453
  %455 = vrot.lane.b32.xlu0 %v211, 32
  %v456 = vpop.permute.xlu0 %455
  %457 = vrot.lane.b32.xlu0 %v212, 32
  %v458 = vpop.permute.xlu0 %457
  %459 = vrot.lane.b32.xlu0 %v213, 32
  %v460 = vpop.permute.xlu0 %459
  %461 = vrot.lane.b32.xlu0 %v214, 32
  %v462 = vpop.permute.xlu0 %461
  %v471 = vsel %vm33, %v142, %v224
  %v472 = vsel %vm33, %v143, %v226
  %v473 = vsel %vm33, %v144, %v228
  %v474 = vsel %vm33, %v145, %v230
  %v475 = vsel %vm33, %v146, %v232
  %v476 = vsel %vm33, %v147, %v234
  %v477 = vsel %vm33, %v148, %v236
  %v478 = vsel %vm33, %v149, %v238
  %v479 = vsel %vm55, %v471, %v256
  %v480 = vsel %vm55, %v472, %v258
  %v481 = vsel %vm55, %v473, %v260
  %v482 = vsel %vm55, %v474, %v262
  %v483 = vsel %vm55, %v475, %v264
  %v484 = vsel %vm55, %v476, %v266
  %v485 = vsel %vm55, %v477, %v268
  %v486 = vsel %vm55, %v478, %v270
  %vm487 = vcmask 97280
  %v488 = vsel %vm487, %v479, %v288
  %v489 = vsel %vm487, %v480, %v290
  %v490 = vsel %vm487, %v481, %v292
  %v491 = vsel %vm487, %v482, %v294
  %v492 = vsel %vm487, %v483, %v296
  %v493 = vsel %vm487, %v484, %v298
  %v494 = vsel %vm487, %v485, %v300
  %v495 = vsel %vm487, %v486, %v302
  %vm496 = vcmask 130048
  %v497 = vsel %vm496, %v488, %v320
  %v498 = vsel %vm496, %v489, %v322
  %v499 = vsel %vm496, %v490, %v324
  %v500 = vsel %vm496, %v491, %v326
  %v501 = vsel %vm496, %v492, %v328
  %v502 = vsel %vm496, %v493, %v330
  %v503 = vsel %vm496, %v494, %v332
  %v504 = vsel %vm496, %v495, %v334
  %vm505 = vcmask 162816
  %v506 = vsel %vm505, %v497, %v352
  %v507 = vsel %vm505, %v498, %v354
  %v508 = vsel %vm505, %v499, %v356
  %v509 = vsel %vm505, %v500, %v358
  %v510 = vsel %vm505, %v501, %v360
  %v511 = vsel %vm505, %v502, %v362
  %v512 = vsel %vm505, %v503, %v364
  %v513 = vsel %vm505, %v504, %v366
  %vm514 = vcmask 195584
  %v515 = vsel %vm514, %v506, %v384
  %v516 = vsel %vm514, %v507, %v386
  %v517 = vsel %vm514, %v508, %v388
  %v518 = vsel %vm514, %v509, %v390
  %v519 = vsel %vm514, %v510, %v392
  %v520 = vsel %vm514, %v511, %v394
  %v521 = vsel %vm514, %v512, %v396
  %v522 = vsel %vm514, %v513, %v398
  %vm523 = vcmask 228352
  %v524 = vsel %vm523, %v515, %v416
  %v525 = vsel %vm523, %v516, %v418
  %v526 = vsel %vm523, %v517, %v420
  %v527 = vsel %vm523, %v518, %v422
  %v528 = vsel %vm523, %v519, %v424
  %v529 = vsel %vm523, %v520, %v426
  %v530 = vsel %vm523, %v521, %v428
  %v531 = vsel %vm523, %v522, %v430
  %vm532 = vcmask 261120
  %v533 = vsel %vm532, %v524, %v448
  %v534 = vsel %vm532, %v525, %v450
  %v535 = vsel %vm532, %v526, %v452
  %v536 = vsel %vm532, %v527, %v454
  %v537 = vsel %vm532, %v528, %v456
  %v538 = vsel %vm532, %v529, %v458
  %v539 = vsel %vm532, %v530, %v460
  %v540 = vsel %vm532, %v531, %v462
  %v541 = vpack.c.bf16 %v534, %v533
  %v542 = vpack.c.bf16 %v536, %v535
  %v543 = vpack.c.bf16 %v538, %v537
  %v544 = vpack.c.bf16 %v540, %v539
  %v545 = vld [vmem:[%s1] sm:$0xf]
  %v546 = vld [vmem:[%s1 + $0x4] sm:$0xf]
  %v547 = vld [vmem:[%s1 + $0x8] sm:$0xf]
  %v548 = vld [vmem:[%s1 + $0xc] sm:$0xf]
  %v549 = vld [vmem:[%s1 + $0x10] sm:$0x3]
  %v550 = vld [vmem:[%s2] sm:$0x1]
  %v552 = vperm.slane %v550, 0
  %v559 = vunpack.c.l.b16 %v545
  %v560 = vunpack.c.l.b16 %v546
  %v561 = vunpack.c.l.b16 %v547
  %v562 = vunpack.c.l.b16 %v548
  %v563 = vunpack.c.l.b16 %v549
  %v564 = vpack.c.b16 %v560, %v559
  %v565 = vpack.c.b16 %v562, %v561
  %v566 = vpack.c.b16 %v563, %v563
  %vm569 = vcmask 293888
  %v571 = vsel %vm569, %v541, 0
  %v574 = vsel %vm569, %v542, 0
  %v577 = vsel %vm569, %v543, 0
  %v580 = vsel %vm569, %v544, 0
  %vm582 = vcmask 1041408
  %v584 = vsel %vm582, %v566, 0
  %586 = vmatpush.bf16.msra.mxu0 0
  %587 = vmatpush.bf16.msra.mxu0 0
  %588 = vmatpush.bf16.msra.mxu0 0
  %589 = vmatpush.bf16.msra.mxu0 0
  %590 = vmatpush.bf16.msra.mxu0 0
  %591 = vmatpush.bf16.msra.mxu0 %v584
  %592 = vmatpush.bf16.msra.mxu0 %v565
  %593 = vmatpush.bf16.msra.mxu0 %v564
  %594 = vmatmul.bf16.gmra.mxu0 %v571
  %v595 = vpop.f32.mrf.mxu0
  %v596 = vadd.f32 %v552, %v595
  %v597 = vpop.f32.mrf.mxu0
  %v598 = vadd.f32 %v552, %v597
  %599 = vmatmul.bf16.gmra.mxu0 %v574
  %v600 = vpop.f32.mrf.mxu0
  %v601 = vadd.f32 %v552, %v600
  %v602 = vpop.f32.mrf.mxu0
  %v603 = vadd.f32 %v552, %v602
  %604 = vmatmul.bf16.gmra.mxu0 %v577
  %v605 = vpop.f32.mrf.mxu0
  %v606 = vadd.f32 %v552, %v605
  %v607 = vpop.f32.mrf.mxu0
  %v608 = vadd.f32 %v552, %v607
  %609 = vmatmul.bf16.gmra.mxu0 %v580
  %v610 = vpop.f32.mrf.mxu0
  %v611 = vadd.f32 %v552, %v610
  %v612 = vpop.f32.mrf.mxu0
  %v613 = vadd.f32 %v552, %v612
  %614 = vdwg.mxu0
  %615 = vst.msk [vmem:[#allocation4] sm:$0xff] %vm55, %v596
  %616 = vst.msk [vmem:[#allocation4 + $0x8] sm:$0xff] %vm55, %v598
  %617 = vst.msk [vmem:[#allocation4 + $0x10] sm:$0xff] %vm55, %v601
  %618 = vst.msk [vmem:[#allocation4 + $0x18] sm:$0xff] %vm55, %v603
  %619 = vst.msk [vmem:[#allocation4 + $0x20] sm:$0xff] %vm55, %v606
  %620 = vst.msk [vmem:[#allocation4 + $0x28] sm:$0xff] %vm55, %v608
  %621 = vst.msk [vmem:[#allocation4 + $0x30] sm:$0xff] %vm55, %v611
  %622 = vst.msk [vmem:[#allocation4 + $0x38] sm:$0xff] %vm55, %v613
  %s623 = scalar_lea.vmem %s0, 256
  %v624 = vld [vmem:[%s623] sm:$0xff]
  %v625 = vld [vmem:[%s623 + $0x8] sm:$0xff]
  %v626 = vld [vmem:[%s623 + $0x10] sm:$0xff]
  %v627 = vld [vmem:[%s623 + $0x18] sm:$0xff]
  %v628 = vld [vmem:[%s623 + $0x20] sm:$0xff]
  %v629 = vld [vmem:[%s623 + $0x28] sm:$0xff]
  %v630 = vld [vmem:[%s623 + $0x30] sm:$0xff]
  %v631 = vld [vmem:[%s623 + $0x38] sm:$0xff]
  %v632 = vld [vmem:[%s623 + $0x40] sm:$0xff]
  %v633 = vld [vmem:[%s623 + $0x48] sm:$0xff]
  %v634 = vld [vmem:[%s623 + $0x50] sm:$0xff]
  %v635 = vld [vmem:[%s623 + $0x58] sm:$0xff]
  %v636 = vld [vmem:[%s623 + $0x60] sm:$0xff]
  %v637 = vld [vmem:[%s623 + $0x68] sm:$0xff]
  %v638 = vld [vmem:[%s623 + $0x70] sm:$0xff]
  %v639 = vld [vmem:[%s623 + $0x78] sm:$0xff]
  %v640 = vld [vmem:[%s623 + $0x80] sm:$0xff]
  %v641 = vld [vmem:[%s623 + $0x88] sm:$0xff]
  %v642 = vld [vmem:[%s623 + $0x90] sm:$0xff]
  %v643 = vld [vmem:[%s623 + $0x98] sm:$0xff]
  %v644 = vld [vmem:[%s623 + $0xa0] sm:$0xff]
  %v645 = vld [vmem:[%s623 + $0xa8] sm:$0xff]
  %v646 = vld [vmem:[%s623 + $0xb0] sm:$0xff]
  %v647 = vld [vmem:[%s623 + $0xb8] sm:$0xff]
  %v648 = vld [vmem:[%s623 + $0xc0] sm:$0xff]
  %v649 = vld [vmem:[%s623 + $0xc8] sm:$0xff]
  %v650 = vld [vmem:[%s623 + $0xd0] sm:$0xff]
  %v651 = vld [vmem:[%s623 + $0xd8] sm:$0xff]
  %v652 = vld [vmem:[%s623 + $0xe0] sm:$0xff]
  %v653 = vld [vmem:[%s623 + $0xe8] sm:$0xff]
  %v654 = vld [vmem:[%s623 + $0xf0] sm:$0xff]
  %v655 = vld [vmem:[%s623 + $0xf8] sm:$0xff]
  %v656 = vmax.f32 %v624, %v632
  %v657 = vmax.f32 %v625, %v633
  %v658 = vmax.f32 %v626, %v634
  %v659 = vmax.f32 %v627, %v635
  %v660 = vmax.f32 %v628, %v636
  %v661 = vmax.f32 %v629, %v637
  %v662 = vmax.f32 %v630, %v638
  %v663 = vmax.f32 %v631, %v639
  %v664 = vmax.f32 %v640, %v648
  %v665 = vmax.f32 %v641, %v649
  %v666 = vmax.f32 %v642, %v650
  %v667 = vmax.f32 %v643, %v651
  %v668 = vmax.f32 %v644, %v652
  %v669 = vmax.f32 %v645, %v653
  %v670 = vmax.f32 %v646, %v654
  %v671 = vmax.f32 %v647, %v655
  %v672 = vmax.f32 %v656, %v664
  %v673 = vmax.f32 %v657, %v665
  %v674 = vmax.f32 %v658, %v666
  %v675 = vmax.f32 %v659, %v667
  %v676 = vmax.f32 %v660, %v668
  %v677 = vmax.f32 %v661, %v669
  %v678 = vmax.f32 %v662, %v670
  %v679 = vmax.f32 %v663, %v671
  %680 = vst.msk [vmem:[%s133 + $0x1] sm:$0xff] %vm33, %v672
  %681 = vst.msk [vmem:[%s133 + $0x11] sm:$0xff] %vm33, %v673
  %682 = vst.msk [vmem:[%s133 + $0x21] sm:$0xff] %vm33, %v674
  %683 = vst.msk [vmem:[%s133 + $0x31] sm:$0xff] %vm33, %v675
  %684 = vst.msk [vmem:[%s133 + $0x41] sm:$0xff] %vm33, %v676
  %685 = vst.msk [vmem:[%s133 + $0x51] sm:$0xff] %vm33, %v677
  %686 = vst.msk [vmem:[%s133 + $0x61] sm:$0xff] %vm33, %v678
  %687 = vst.msk [vmem:[%s133 + $0x71] sm:$0xff] %vm33, %v679
  %v688 = vld [vmem:[#allocation2] sm:$0xff]
  %v689 = vld [vmem:[#allocation2 + $0x10] sm:$0xff]
  %v690 = vld [vmem:[#allocation2 + $0x20] sm:$0xff]
  %v691 = vld [vmem:[#allocation2 + $0x30] sm:$0xff]
  %v692 = vld [vmem:[#allocation2 + $0x40] sm:$0xff]
  %v693 = vld [vmem:[#allocation2 + $0x50] sm:$0xff]
  %v694 = vld [vmem:[#allocation2 + $0x60] sm:$0xff]
  %v695 = vld [vmem:[#allocation2 + $0x70] sm:$0xff]
  %v696 = vld [vmem:[#allocation2 + $0x1] sm:$0xff]
  %v697 = vld [vmem:[#allocation2 + $0x11] sm:$0xff]
  %v698 = vld [vmem:[#allocation2 + $0x21] sm:$0xff]
  %v699 = vld [vmem:[#allocation2 + $0x31] sm:$0xff]
  %v700 = vld [vmem:[#allocation2 + $0x41] sm:$0xff]
  %v701 = vld [vmem:[#allocation2 + $0x51] sm:$0xff]
  %v702 = vld [vmem:[#allocation2 + $0x61] sm:$0xff]
  %v703 = vld [vmem:[#allocation2 + $0x71] sm:$0xff]
  %v704 = vld [vmem:[#allocation2 + $0x2] sm:$0xff]
  %v705 = vld [vmem:[#allocation2 + $0x12] sm:$0xff]
  %v706 = vld [vmem:[#allocation2 + $0x22] sm:$0xff]
  %v707 = vld [vmem:[#allocation2 + $0x32] sm:$0xff]
  %v708 = vld [vmem:[#allocation2 + $0x42] sm:$0xff]
  %v709 = vld [vmem:[#allocation2 + $0x52] sm:$0xff]
  %v710 = vld [vmem:[#allocation2 + $0x62] sm:$0xff]
  %v711 = vld [vmem:[#allocation2 + $0x72] sm:$0xff]
  %v712 = vld [vmem:[%s133] sm:$0xff]
  %v713 = vld [vmem:[%s133 + $0x10] sm:$0xff]
  %v714 = vld [vmem:[%s133 + $0x20] sm:$0xff]
  %v715 = vld [vmem:[%s133 + $0x30] sm:$0xff]
  %v716 = vld [vmem:[%s133 + $0x40] sm:$0xff]
  %v717 = vld [vmem:[%s133 + $0x50] sm:$0xff]
  %v718 = vld [vmem:[%s133 + $0x60] sm:$0xff]
  %v719 = vld [vmem:[%s133 + $0x70] sm:$0xff]
  %v720 = vld [vmem:[%s133 + $0x1] sm:$0xff]
  %v721 = vld [vmem:[%s133 + $0x11] sm:$0xff]
  %v722 = vld [vmem:[%s133 + $0x21] sm:$0xff]
  %v723 = vld [vmem:[%s133 + $0x31] sm:$0xff]
  %v724 = vld [vmem:[%s133 + $0x41] sm:$0xff]
  %v725 = vld [vmem:[%s133 + $0x51] sm:$0xff]
  %v726 = vld [vmem:[%s133 + $0x61] sm:$0xff]
  %v727 = vld [vmem:[%s133 + $0x71] sm:$0xff]
  %v728 = vld [vmem:[%s133 + $0x2] sm:$0xff]
  %v729 = vld [vmem:[%s133 + $0x12] sm:$0xff]
  %v730 = vld [vmem:[%s133 + $0x22] sm:$0xff]
  %v731 = vld [vmem:[%s133 + $0x32] sm:$0xff]
  %v732 = vld [vmem:[%s133 + $0x42] sm:$0xff]
  %v733 = vld [vmem:[%s133 + $0x52] sm:$0xff]
  %v734 = vld [vmem:[%s133 + $0x62] sm:$0xff]
  %v735 = vld [vmem:[%s133 + $0x72] sm:$0xff]
  %v736 = vld [vmem:[%s190] sm:$0xff]
  %v737 = vld [vmem:[%s190 + $0x10] sm:$0xff]
  %v738 = vld [vmem:[%s190 + $0x20] sm:$0xff]
  %v739 = vld [vmem:[%s190 + $0x30] sm:$0xff]
  %v740 = vld [vmem:[%s190 + $0x40] sm:$0xff]
  %v741 = vld [vmem:[%s190 + $0x50] sm:$0xff]
  %v742 = vld [vmem:[%s190 + $0x60] sm:$0xff]
  %v743 = vld [vmem:[%s190 + $0x70] sm:$0xff]
  %v744 = vld [vmem:[%s190 + $0x1] sm:$0xff]
  %v745 = vld [vmem:[%s190 + $0x11] sm:$0xff]
  %v746 = vld [vmem:[%s190 + $0x21] sm:$0xff]
  %v747 = vld [vmem:[%s190 + $0x31] sm:$0xff]
  %v748 = vld [vmem:[%s190 + $0x41] sm:$0xff]
  %v749 = vld [vmem:[%s190 + $0x51] sm:$0xff]
  %v750 = vld [vmem:[%s190 + $0x61] sm:$0xff]
  %v751 = vld [vmem:[%s190 + $0x71] sm:$0xff]
  %v752 = vld [vmem:[%s190 + $0x2] sm:$0xff]
  %v753 = vld [vmem:[%s190 + $0x12] sm:$0xff]
  %v754 = vld [vmem:[%s190 + $0x22] sm:$0xff]
  %v755 = vld [vmem:[%s190 + $0x32] sm:$0xff]
  %v756 = vld [vmem:[%s190 + $0x42] sm:$0xff]
  %v757 = vld [vmem:[%s190 + $0x52] sm:$0xff]
  %v758 = vld [vmem:[%s190 + $0x62] sm:$0xff]
  %v759 = vld [vmem:[%s190 + $0x72] sm:$0xff]
  %768 = vrot.lane.b32.xlu0 %v696, 4
  %v769 = vpop.permute.xlu0 %768
  %770 = vrot.lane.b32.xlu0 %v697, 4
  %v771 = vpop.permute.xlu0 %770
  %772 = vrot.lane.b32.xlu0 %v698, 4
  %v773 = vpop.permute.xlu0 %772
  %774 = vrot.lane.b32.xlu0 %v699, 4
  %v775 = vpop.permute.xlu0 %774
  %776 = vrot.lane.b32.xlu0 %v700, 4
  %v777 = vpop.permute.xlu0 %776
  %778 = vrot.lane.b32.xlu0 %v701, 4
  %v779 = vpop.permute.xlu0 %778
  %780 = vrot.lane.b32.xlu0 %v702, 4
  %v781 = vpop.permute.xlu0 %780
  %782 = vrot.lane.b32.xlu0 %v703, 4
  %v783 = vpop.permute.xlu0 %782
  %800 = vrot.lane.b32.xlu0 %v704, 8
  %v801 = vpop.permute.xlu0 %800
  %802 = vrot.lane.b32.xlu0 %v705, 8
  %v803 = vpop.permute.xlu0 %802
  %804 = vrot.lane.b32.xlu0 %v706, 8
  %v805 = vpop.permute.xlu0 %804
  %806 = vrot.lane.b32.xlu0 %v707, 8
  %v807 = vpop.permute.xlu0 %806
  %808 = vrot.lane.b32.xlu0 %v708, 8
  %v809 = vpop.permute.xlu0 %808
  %810 = vrot.lane.b32.xlu0 %v709, 8
  %v811 = vpop.permute.xlu0 %810
  %812 = vrot.lane.b32.xlu0 %v710, 8
  %v813 = vpop.permute.xlu0 %812
  %814 = vrot.lane.b32.xlu0 %v711, 8
  %v815 = vpop.permute.xlu0 %814
  %832 = vrot.lane.b32.xlu0 %v712, 12
  %v833 = vpop.permute.xlu0 %832
  %834 = vrot.lane.b32.xlu0 %v713, 12
  %v835 = vpop.permute.xlu0 %834
  %836 = vrot.lane.b32.xlu0 %v714, 12
  %v837 = vpop.permute.xlu0 %836
  %838 = vrot.lane.b32.xlu0 %v715, 12
  %v839 = vpop.permute.xlu0 %838
  %840 = vrot.lane.b32.xlu0 %v716, 12
  %v841 = vpop.permute.xlu0 %840
  %842 = vrot.lane.b32.xlu0 %v717, 12
  %v843 = vpop.permute.xlu0 %842
  %844 = vrot.lane.b32.xlu0 %v718, 12
  %v845 = vpop.permute.xlu0 %844
  %846 = vrot.lane.b32.xlu0 %v719, 12
  %v847 = vpop.permute.xlu0 %846
  %864 = vrot.lane.b32.xlu0 %v720, 16
  %v865 = vpop.permute.xlu0 %864
  %866 = vrot.lane.b32.xlu0 %v721, 16
  %v867 = vpop.permute.xlu0 %866
  %868 = vrot.lane.b32.xlu0 %v722, 16
  %v869 = vpop.permute.xlu0 %868
  %870 = vrot.lane.b32.xlu0 %v723, 16
  %v871 = vpop.permute.xlu0 %870
  %872 = vrot.lane.b32.xlu0 %v724, 16
  %v873 = vpop.permute.xlu0 %872
  %874 = vrot.lane.b32.xlu0 %v725, 16
  %v875 = vpop.permute.xlu0 %874
  %876 = vrot.lane.b32.xlu0 %v726, 16
  %v877 = vpop.permute.xlu0 %876
  %878 = vrot.lane.b32.xlu0 %v727, 16
  %v879 = vpop.permute.xlu0 %878
  %896 = vrot.lane.b32.xlu0 %v728, 20
  %v897 = vpop.permute.xlu0 %896
  %898 = vrot.lane.b32.xlu0 %v729, 20
  %v899 = vpop.permute.xlu0 %898
  %900 = vrot.lane.b32.xlu0 %v730, 20
  %v901 = vpop.permute.xlu0 %900
  %902 = vrot.lane.b32.xlu0 %v731, 20
  %v903 = vpop.permute.xlu0 %902
  %904 = vrot.lane.b32.xlu0 %v732, 20
  %v905 = vpop.permute.xlu0 %904
  %906 = vrot.lane.b32.xlu0 %v733, 20
  %v907 = vpop.permute.xlu0 %906
  %908 = vrot.lane.b32.xlu0 %v734, 20
  %v909 = vpop.permute.xlu0 %908
  %910 = vrot.lane.b32.xlu0 %v735, 20
  %v911 = vpop.permute.xlu0 %910
  %928 = vrot.lane.b32.xlu0 %v736, 24
  %v929 = vpop.permute.xlu0 %928
  %930 = vrot.lane.b32.xlu0 %v737, 24
  %v931 = vpop.permute.xlu0 %930
  %932 = vrot.lane.b32.xlu0 %v738, 24
  %v933 = vpop.permute.xlu0 %932
  %934 = vrot.lane.b32.xlu0 %v739, 24
  %v935 = vpop.permute.xlu0 %934
  %936 = vrot.lane.b32.xlu0 %v740, 24
  %v937 = vpop.permute.xlu0 %936
  %938 = vrot.lane.b32.xlu0 %v741, 24
  %v939 = vpop.permute.xlu0 %938
  %940 = vrot.lane.b32.xlu0 %v742, 24
  %v941 = vpop.permute.xlu0 %940
  %942 = vrot.lane.b32.xlu0 %v743, 24
  %v943 = vpop.permute.xlu0 %942
  %960 = vrot.lane.b32.xlu0 %v744, 28
  %v961 = vpop.permute.xlu0 %960
  %962 = vrot.lane.b32.xlu0 %v745, 28
  %v963 = vpop.permute.xlu0 %962
  %964 = vrot.lane.b32.xlu0 %v746, 28
  %v965 = vpop.permute.xlu0 %964
  %966 = vrot.lane.b32.xlu0 %v747, 28
  %v967 = vpop.permute.xlu0 %966
  %968 = vrot.lane.b32.xlu0 %v748, 28
  %v969 = vpop.permute.xlu0 %968
  %970 = vrot.lane.b32.xlu0 %v749, 28
  %v971 = vpop.permute.xlu0 %970
  %972 = vrot.lane.b32.xlu0 %v750, 28
  %v973 = vpop.permute.xlu0 %972
  %974 = vrot.lane.b32.xlu0 %v751, 28
  %v975 = vpop.permute.xlu0 %974
  %992 = vrot.lane.b32.xlu0 %v752, 32
  %v993 = vpop.permute.xlu0 %992
  %994 = vrot.lane.b32.xlu0 %v753, 32
  %v995 = vpop.permute.xlu0 %994
  %996 = vrot.lane.b32.xlu0 %v754, 32
  %v997 = vpop.permute.xlu0 %996
  %998 = vrot.lane.b32.xlu0 %v755, 32
  %v999 = vpop.permute.xlu0 %998
  %1000 = vrot.lane.b32.xlu0 %v756, 32
  %v1001 = vpop.permute.xlu0 %1000
  %1002 = vrot.lane.b32.xlu0 %v757, 32
  %v1003 = vpop.permute.xlu0 %1002
  %1004 = vrot.lane.b32.xlu0 %v758, 32
  %v1005 = vpop.permute.xlu0 %1004
  %1006 = vrot.lane.b32.xlu0 %v759, 32
  %v1007 = vpop.permute.xlu0 %1006
  %v1016 = vsel %vm33, %v688, %v769
  %v1017 = vsel %vm33, %v689, %v771
  %v1018 = vsel %vm33, %v690, %v773
  %v1019 = vsel %vm33, %v691, %v775
  %v1020 = vsel %vm33, %v692, %v777
  %v1021 = vsel %vm33, %v693, %v779
  %v1022 = vsel %vm33, %v694, %v781
  %v1023 = vsel %vm33, %v695, %v783
  %v1024 = vsel %vm55, %v1016, %v801
  %v1025 = vsel %vm55, %v1017, %v803
  %v1026 = vsel %vm55, %v1018, %v805
  %v1027 = vsel %vm55, %v1019, %v807
  %v1028 = vsel %vm55, %v1020, %v809
  %v1029 = vsel %vm55, %v1021, %v811
  %v1030 = vsel %vm55, %v1022, %v813
  %v1031 = vsel %vm55, %v1023, %v815
  %v1032 = vsel %vm487, %v1024, %v833
  %v1033 = vsel %vm487, %v1025, %v835
  %v1034 = vsel %vm487, %v1026, %v837
  %v1035 = vsel %vm487, %v1027, %v839
  %v1036 = vsel %vm487, %v1028, %v841
  %v1037 = vsel %vm487, %v1029, %v843
  %v1038 = vsel %vm487, %v1030, %v845
  %v1039 = vsel %vm487, %v1031, %v847
  %v1040 = vsel %vm496, %v1032, %v865
  %v1041 = vsel %vm496, %v1033, %v867
  %v1042 = vsel %vm496, %v1034, %v869
  %v1043 = vsel %vm496, %v1035, %v871
  %v1044 = vsel %vm496, %v1036, %v873
  %v1045 = vsel %vm496, %v1037, %v875
  %v1046 = vsel %vm496, %v1038, %v877
  %v1047 = vsel %vm496, %v1039, %v879
  %v1048 = vsel %vm505, %v1040, %v897
  %v1049 = vsel %vm505, %v1041, %v899
  %v1050 = vsel %vm505, %v1042, %v901
  %v1051 = vsel %vm505, %v1043, %v903
  %v1052 = vsel %vm505, %v1044, %v905
  %v1053 = vsel %vm505, %v1045, %v907
  %v1054 = vsel %vm505, %v1046, %v909
  %v1055 = vsel %vm505, %v1047, %v911
  %v1056 = vsel %vm514, %v1048, %v929
  %v1057 = vsel %vm514, %v1049, %v931
  %v1058 = vsel %vm514, %v1050, %v933
  %v1059 = vsel %vm514, %v1051, %v935
  %v1060 = vsel %vm514, %v1052, %v937
  %v1061 = vsel %vm514, %v1053, %v939
  %v1062 = vsel %vm514, %v1054, %v941
  %v1063 = vsel %vm514, %v1055, %v943
  %v1064 = vsel %vm523, %v1056, %v961
  %v1065 = vsel %vm523, %v1057, %v963
  %v1066 = vsel %vm523, %v1058, %v965
  %v1067 = vsel %vm523, %v1059, %v967
  %v1068 = vsel %vm523, %v1060, %v969
  %v1069 = vsel %vm523, %v1061, %v971
  %v1070 = vsel %vm523, %v1062, %v973
  %v1071 = vsel %vm523, %v1063, %v975
  %v1072 = vsel %vm532, %v1064, %v993
  %v1073 = vsel %vm532, %v1065, %v995
  %v1074 = vsel %vm532, %v1066, %v997
  %v1075 = vsel %vm532, %v1067, %v999
  %v1076 = vsel %vm532, %v1068, %v1001
  %v1077 = vsel %vm532, %v1069, %v1003
  %v1078 = vsel %vm532, %v1070, %v1005
  %v1079 = vsel %vm532, %v1071, %v1007
  %v1080 = vpack.c.bf16 %v1073, %v1072
  %v1081 = vpack.c.bf16 %v1075, %v1074
  %v1082 = vpack.c.bf16 %v1077, %v1076
  %v1083 = vpack.c.bf16 %v1079, %v1078
  %v1084 = vld [vmem:[%s1] sm:$0xf]
  %v1085 = vld [vmem:[%s1 + $0x4] sm:$0xf]
  %v1086 = vld [vmem:[%s1 + $0x8] sm:$0xf]
  %v1087 = vld [vmem:[%s1 + $0xc] sm:$0xf]
  %v1088 = vld [vmem:[%s1 + $0x10] sm:$0x3]
  %v1089 = vld [vmem:[%s2] sm:$0x1]
  %v1091 = vperm.slane %v1089, 0
  %v1098 = vunpack.c.l.b16 %v1084
  %v1099 = vunpack.c.l.b16 %v1085
  %v1100 = vunpack.c.l.b16 %v1086
  %v1101 = vunpack.c.l.b16 %v1087
  %v1102 = vunpack.c.l.b16 %v1088
  %v1103 = vpack.c.b16 %v1099, %v1098
  %v1104 = vpack.c.b16 %v1101, %v1100
  %v1105 = vpack.c.b16 %v1102, %v1102
  %v1109 = vsel %vm569, %v1080, 0
  %v1112 = vsel %vm569, %v1081, 0
  %v1115 = vsel %vm569, %v1082, 0
  %v1118 = vsel %vm569, %v1083, 0
  %v1121 = vsel %vm582, %v1105, 0
  %1123 = vmatpush.bf16.msra.mxu0 0
  %1124 = vmatpush.bf16.msra.mxu0 0
  %1125 = vmatpush.bf16.msra.mxu0 0
  %1126 = vmatpush.bf16.msra.mxu0 0
  %1127 = vmatpush.bf16.msra.mxu0 0
  %1128 = vmatpush.bf16.msra.mxu0 %v1121
  %1129 = vmatpush.bf16.msra.mxu0 %v1104
  %1130 = vmatpush.bf16.msra.mxu0 %v1103
  %1131 = vmatmul.bf16.gmra.mxu0 %v1109
  %v1132 = vpop.f32.mrf.mxu0
  %v1133 = vadd.f32 %v1091, %v1132
  %v1134 = vpop.f32.mrf.mxu0
  %v1135 = vadd.f32 %v1091, %v1134
  %1136 = vmatmul.bf16.gmra.mxu0 %v1112
  %v1137 = vpop.f32.mrf.mxu0
  %v1138 = vadd.f32 %v1091, %v1137
  %v1139 = vpop.f32.mrf.mxu0
  %v1140 = vadd.f32 %v1091, %v1139
  %1141 = vmatmul.bf16.gmra.mxu0 %v1115
  %v1142 = vpop.f32.mrf.mxu0
  %v1143 = vadd.f32 %v1091, %v1142
  %v1144 = vpop.f32.mrf.mxu0
  %v1145 = vadd.f32 %v1091, %v1144
  %1146 = vmatmul.bf16.gmra.mxu0 %v1118
  %v1147 = vpop.f32.mrf.mxu0
  %v1148 = vadd.f32 %v1091, %v1147
  %v1149 = vpop.f32.mrf.mxu0
  %v1150 = vadd.f32 %v1091, %v1149
  %1151 = vdwg.mxu0
  %s1152 = scalar_lea.vmem [#allocation4], 64
  %1153 = vst.msk [vmem:[%s1152] sm:$0xff] %vm55, %v1133
  %1154 = vst.msk [vmem:[%s1152 + $0x8] sm:$0xff] %vm55, %v1135
  %1155 = vst.msk [vmem:[%s1152 + $0x10] sm:$0xff] %vm55, %v1138
  %1156 = vst.msk [vmem:[%s1152 + $0x18] sm:$0xff] %vm55, %v1140
  %1157 = vst.msk [vmem:[%s1152 + $0x20] sm:$0xff] %vm55, %v1143
  %1158 = vst.msk [vmem:[%s1152 + $0x28] sm:$0xff] %vm55, %v1145
  %1159 = vst.msk [vmem:[%s1152 + $0x30] sm:$0xff] %vm55, %v1148
  %1160 = vst.msk [vmem:[%s1152 + $0x38] sm:$0xff] %vm55, %v1150
  %v1161 = vld [vmem:[#allocation4] sm:$0xff]
  %v1162 = vld [vmem:[#allocation4 + $0x8] sm:$0xff]
  %v1163 = vld [vmem:[#allocation4 + $0x10] sm:$0xff]
  %v1164 = vld [vmem:[#allocation4 + $0x18] sm:$0xff]
  %v1165 = vld [vmem:[#allocation4 + $0x20] sm:$0xff]
  %v1166 = vld [vmem:[#allocation4 + $0x28] sm:$0xff]
  %v1167 = vld [vmem:[#allocation4 + $0x30] sm:$0xff]
  %v1168 = vld [vmem:[#allocation4 + $0x38] sm:$0xff]
  %v1169 = vld [vmem:[#allocation4 + $0x40] sm:$0xff]
  %v1170 = vld [vmem:[#allocation4 + $0x48] sm:$0xff]
  %v1171 = vld [vmem:[#allocation4 + $0x50] sm:$0xff]
  %v1172 = vld [vmem:[#allocation4 + $0x58] sm:$0xff]
  %v1173 = vld [vmem:[#allocation4 + $0x60] sm:$0xff]
  %v1174 = vld [vmem:[#allocation4 + $0x68] sm:$0xff]
  %v1175 = vld [vmem:[#allocation4 + $0x70] sm:$0xff]
  %v1176 = vld [vmem:[#allocation4 + $0x78] sm:$0xff]
  %v1177 = vsel %vm55, %v1161, 0.0
  %v1178 = vsel %vm55, %v1162, 0.0
  %v1179 = vadd.f32 %v1177, %v1178
  %v1180 = vsel %vm55, %v1163, 0.0
  %v1181 = vadd.f32 %v1179, %v1180
  %v1182 = vsel %vm55, %v1164, 0.0
  %v1183 = vadd.f32 %v1181, %v1182
  %v1184 = vsel %vm55, %v1165, 0.0
  %v1185 = vadd.f32 %v1183, %v1184
  %v1186 = vsel %vm55, %v1166, 0.0
  %v1187 = vadd.f32 %v1185, %v1186
  %v1188 = vsel %vm55, %v1167, 0.0
  %v1189 = vadd.f32 %v1187, %v1188
  %v1190 = vsel %vm55, %v1168, 0.0
  %v1191 = vadd.f32 %v1189, %v1190
  %v1192 = vsel %vm55, %v1169, 0.0
  %v1193 = vadd.f32 %v1191, %v1192
  %v1194 = vsel %vm55, %v1170, 0.0
  %v1195 = vadd.f32 %v1193, %v1194
  %v1196 = vsel %vm55, %v1171, 0.0
  %v1197 = vadd.f32 %v1195, %v1196
  %v1198 = vsel %vm55, %v1172, 0.0
  %v1199 = vadd.f32 %v1197, %v1198
  %v1200 = vsel %vm55, %v1173, 0.0
  %v1201 = vadd.f32 %v1199, %v1200
  %v1202 = vsel %vm55, %v1174, 0.0
  %v1203 = vadd.f32 %v1201, %v1202
  %v1204 = vsel %vm55, %v1175, 0.0
  %v1205 = vadd.f32 %v1203, %v1204
  %v1206 = vsel %vm55, %v1176, 0.0
  %v1207 = vadd.f32 %v1205, %v1206
  %v1208 = vrot.slane %v1207, 4
  %v1209 = vadd.f32 %v1207, %v1208
  %v1210 = vrot.slane %v1209, 2
  %v1211 = vadd.f32 %v1209, %v1210
  %v1212 = vrot.slane %v1211, 1
  %v1213 = vadd.f32 %v1211, %v1212
  %v1214 = vmul.f32 %v1161, %v1161
  %v1215 = vmul.f32 %v1162, %v1162
  %v1216 = vmul.f32 %v1163, %v1163
  %v1217 = vmul.f32 %v1164, %v1164
  %v1218 = vmul.f32 %v1165, %v1165
  %v1219 = vmul.f32 %v1166, %v1166
  %v1220 = vmul.f32 %v1167, %v1167
  %v1221 = vmul.f32 %v1168, %v1168
  %v1222 = vmul.f32 %v1169, %v1169
  %v1223 = vmul.f32 %v1170, %v1170
  %v1224 = vmul.f32 %v1171, %v1171
  %v1225 = vmul.f32 %v1172, %v1172
  %v1226 = vmul.f32 %v1173, %v1173
  %v1227 = vmul.f32 %v1174, %v1174
  %v1228 = vmul.f32 %v1175, %v1175
  %v1229 = vmul.f32 %v1176, %v1176
  %v1230 = vsel %vm55, %v1214, 0.0
  %v1231 = vsel %vm55, %v1215, 0.0
  %v1232 = vadd.f32 %v1230, %v1231
  %v1233 = vsel %vm55, %v1216, 0.0
  %v1234 = vadd.f32 %v1232, %v1233
  %v1235 = vsel %vm55, %v1217, 0.0
  %v1236 = vadd.f32 %v1234, %v1235
  %v1237 = vsel %vm55, %v1218, 0.0
  %v1238 = vadd.f32 %v1236, %v1237
  %v1239 = vsel %vm55, %v1219, 0.0
  %v1240 = vadd.f32 %v1238, %v1239
  %v1241 = vsel %vm55, %v1220, 0.0
  %v1242 = vadd.f32 %v1240, %v1241
  %v1243 = vsel %vm55, %v1221, 0.0
  %v1244 = vadd.f32 %v1242, %v1243
  %v1245 = vsel %vm55, %v1222, 0.0
  %v1246 = vadd.f32 %v1244, %v1245
  %v1247 = vsel %vm55, %v1223, 0.0
  %v1248 = vadd.f32 %v1246, %v1247
  %v1249 = vsel %vm55, %v1224, 0.0
  %v1250 = vadd.f32 %v1248, %v1249
  %v1251 = vsel %vm55, %v1225, 0.0
  %v1252 = vadd.f32 %v1250, %v1251
  %v1253 = vsel %vm55, %v1226, 0.0
  %v1254 = vadd.f32 %v1252, %v1253
  %v1255 = vsel %vm55, %v1227, 0.0
  %v1256 = vadd.f32 %v1254, %v1255
  %v1257 = vsel %vm55, %v1228, 0.0
  %v1258 = vadd.f32 %v1256, %v1257
  %v1259 = vsel %vm55, %v1229, 0.0
  %v1260 = vadd.f32 %v1258, %v1259
  %v1261 = vrot.slane %v1260, 4
  %v1262 = vadd.f32 %v1260, %v1261
  %v1263 = vrot.slane %v1262, 2
  %v1264 = vadd.f32 %v1262, %v1263
  %v1265 = vrot.slane %v1264, 1
  %v1266 = vadd.f32 %v1264, %v1265
  %v1267 = vrcp.pop 128.0
  %v1268 = vmul.f32 128.0, %v1267
  %v1269 = vsub.f32 1.0, %v1268
  %v1270 = vmul.f32 %v1267, %v1269
  %v1271 = vadd.f32 %v1267, %v1270
  %vm1272 = vweird.f32 %v1267
  %v1273 = vsel %vm1272, %v1267, %v1271
  %v1274 = vmul.f32 %v1213, %v1273
  %v1275 = vmul.f32 %v1266, %v1273
  %v1276 = vmul.f32 %v1274, %v1274
  %v1277 = vsub.f32 %v1275, %v1276
  %v1278 = vmax.f32 %v1277, 0.0
  %v1279 = vld [vmem:[%s3] sm:$0x1]
  %v1280 = vadd.f32 %v1278, 1e-05
  %v1281 = vrsqrt.pop %v1280
  %v1282 = vmul.f32 %v1281, %v1280
  %v1283 = vmul.f32 %v1282, %v1281
  %v1284 = vmul.f32 0.5, %v1283
  %v1285 = vsub.f32 1.5, %v1284
  %v1286 = vmul.f32 %v1281, %v1285
  %vm1287 = vweird.f32 %v1280
  %vm1288 = vweird.f32 %v1281
  %vm1289 = vmor %vm1287, %vm1288
  %v1290 = vsel %vm1289, %v1281, %v1286
  %v1291 = vmul.f32 %v1279, %v1290
  %v1292 = vld [vmem:[%s4] sm:$0x1]
  %v1293 = vmul.f32 %v1274, %v1291
  %v1294 = vsub.f32 %v1292, %v1293
  %v1296 = vperm.slane %v1291, 0
  %v1298 = vmul.f32 %v1161, %v1296
  %v1299 = vmul.f32 %v1162, %v1296
  %v1300 = vmul.f32 %v1163, %v1296
  %v1301 = vmul.f32 %v1164, %v1296
  %v1302 = vmul.f32 %v1165, %v1296
  %v1303 = vmul.f32 %v1166, %v1296
  %v1304 = vmul.f32 %v1167, %v1296
  %v1305 = vmul.f32 %v1168, %v1296
  %v1307 = vperm.slane %v1294, 0
  %v1309 = vadd.f32 %v1298, %v1307
  %v1310 = vadd.f32 %v1299, %v1307
  %v1311 = vadd.f32 %v1300, %v1307
  %v1312 = vadd.f32 %v1301, %v1307
  %v1313 = vadd.f32 %v1302, %v1307
  %v1314 = vadd.f32 %v1303, %v1307
  %v1315 = vadd.f32 %v1304, %v1307
  %v1316 = vadd.f32 %v1305, %v1307
  %v1317 = vmax.f32 %v1309, 0.0
  %v1318 = vmax.f32 %v1310, 0.0
  %v1319 = vmax.f32 %v1311, 0.0
  %v1320 = vmax.f32 %v1312, 0.0
  %v1321 = vmax.f32 %v1313, 0.0
  %v1322 = vmax.f32 %v1314, 0.0
  %v1323 = vmax.f32 %v1315, 0.0
  %v1324 = vmax.f32 %v1316, 0.0
  %s1325 = scalar_lea.vmem [#allocation3], 16
  %1326 = vst.msk [vmem:[%s1325 + $0x1] sm:$0xff] %vm55, %v1317
  %1327 = vst.msk [vmem:[%s1325 + $0x11] sm:$0xff] %vm55, %v1318
  %1328 = vst.msk [vmem:[%s1325 + $0x21] sm:$0xff] %vm55, %v1319
  %1329 = vst.msk [vmem:[%s1325 + $0x31] sm:$0xff] %vm55, %v1320
  %1330 = vst.msk [vmem:[%s1325 + $0x41] sm:$0xff] %vm55, %v1321
  %1331 = vst.msk [vmem:[%s1325 + $0x51] sm:$0xff] %vm55, %v1322
  %1332 = vst.msk [vmem:[%s1325 + $0x61] sm:$0xff] %vm55, %v1323
  %1333 = vst.msk [vmem:[%s1325 + $0x71] sm:$0xff] %vm55, %v1324
  %v1334 = vld [vmem:[#allocation3] sm:$0xff]
  %v1335 = vld [vmem:[#allocation3 + $0x10] sm:$0xff]
  %v1336 = vld [vmem:[#allocation3 + $0x20] sm:$0xff]
  %v1337 = vld [vmem:[#allocation3 + $0x30] sm:$0xff]
  %v1338 = vld [vmem:[#allocation3 + $0x40] sm:$0xff]
  %v1339 = vld [vmem:[#allocation3 + $0x50] sm:$0xff]
  %v1340 = vld [vmem:[#allocation3 + $0x60] sm:$0xff]
  %v1341 = vld [vmem:[#allocation3 + $0x70] sm:$0xff]
  %v1342 = vld [vmem:[#allocation3 + $0x1] sm:$0xff]
  %v1343 = vld [vmem:[#allocation3 + $0x11] sm:$0xff]
  %v1344 = vld [vmem:[#allocation3 + $0x21] sm:$0xff]
  %v1345 = vld [vmem:[#allocation3 + $0x31] sm:$0xff]
  %v1346 = vld [vmem:[#allocation3 + $0x41] sm:$0xff]
  %v1347 = vld [vmem:[#allocation3 + $0x51] sm:$0xff]
  %v1348 = vld [vmem:[#allocation3 + $0x61] sm:$0xff]
  %v1349 = vld [vmem:[#allocation3 + $0x71] sm:$0xff]
  %v1350 = vld [vmem:[#allocation3 + $0x2] sm:$0xff]
  %v1351 = vld [vmem:[#allocation3 + $0x12] sm:$0xff]
  %v1352 = vld [vmem:[#allocation3 + $0x22] sm:$0xff]
  %v1353 = vld [vmem:[#allocation3 + $0x32] sm:$0xff]
  %v1354 = vld [vmem:[#allocation3 + $0x42] sm:$0xff]
  %v1355 = vld [vmem:[#allocation3 + $0x52] sm:$0xff]
  %v1356 = vld [vmem:[#allocation3 + $0x62] sm:$0xff]
  %v1357 = vld [vmem:[#allocation3 + $0x72] sm:$0xff]
  %v1358 = vld [vmem:[%s1325] sm:$0xff]
  %v1359 = vld [vmem:[%s1325 + $0x10] sm:$0xff]
  %v1360 = vld [vmem:[%s1325 + $0x20] sm:$0xff]
  %v1361 = vld [vmem:[%s1325 + $0x30] sm:$0xff]
  %v1362 = vld [vmem:[%s1325 + $0x40] sm:$0xff]
  %v1363 = vld [vmem:[%s1325 + $0x50] sm:$0xff]
  %v1364 = vld [vmem:[%s1325 + $0x60] sm:$0xff]
  %v1365 = vld [vmem:[%s1325 + $0x70] sm:$0xff]
  %v1366 = vld [vmem:[%s1325 + $0x1] sm:$0xff]
  %v1367 = vld [vmem:[%s1325 + $0x11] sm:$0xff]
  %v1368 = vld [vmem:[%s1325 + $0x21] sm:$0xff]
  %v1369 = vld [vmem:[%s1325 + $0x31] sm:$0xff]
  %v1370 = vld [vmem:[%s1325 + $0x41] sm:$0xff]
  %v1371 = vld [vmem:[%s1325 + $0x51] sm:$0xff]
  %v1372 = vld [vmem:[%s1325 + $0x61] sm:$0xff]
  %v1373 = vld [vmem:[%s1325 + $0x71] sm:$0xff]
  %v1374 = vld [vmem:[%s1325 + $0x2] sm:$0xff]
  %v1375 = vld [vmem:[%s1325 + $0x12] sm:$0xff]
  %v1376 = vld [vmem:[%s1325 + $0x22] sm:$0xff]
  %v1377 = vld [vmem:[%s1325 + $0x32] sm:$0xff]
  %v1378 = vld [vmem:[%s1325 + $0x42] sm:$0xff]
  %v1379 = vld [vmem:[%s1325 + $0x52] sm:$0xff]
  %v1380 = vld [vmem:[%s1325 + $0x62] sm:$0xff]
  %v1381 = vld [vmem:[%s1325 + $0x72] sm:$0xff]
  %s1382 = scalar_lea.vmem [#allocation3], 32
  %v1383 = vld [vmem:[%s1382] sm:$0xff]
  %v1384 = vld [vmem:[%s1382 + $0x10] sm:$0xff]
  %v1385 = vld [vmem:[%s1382 + $0x20] sm:$0xff]
  %v1386 = vld [vmem:[%s1382 + $0x30] sm:$0xff]
  %v1387 = vld [vmem:[%s1382 + $0x40] sm:$0xff]
  %v1388 = vld [vmem:[%s1382 + $0x50] sm:$0xff]
  %v1389 = vld [vmem:[%s1382 + $0x60] sm:$0xff]
  %v1390 = vld [vmem:[%s1382 + $0x70] sm:$0xff]
  %v1391 = vld [vmem:[%s1382 + $0x1] sm:$0xff]
  %v1392 = vld [vmem:[%s1382 + $0x11] sm:$0xff]
  %v1393 = vld [vmem:[%s1382 + $0x21] sm:$0xff]
  %v1394 = vld [vmem:[%s1382 + $0x31] sm:$0xff]
  %v1395 = vld [vmem:[%s1382 + $0x41] sm:$0xff]
  %v1396 = vld [vmem:[%s1382 + $0x51] sm:$0xff]
  %v1397 = vld [vmem:[%s1382 + $0x61] sm:$0xff]
  %v1398 = vld [vmem:[%s1382 + $0x71] sm:$0xff]
  %v1399 = vld [vmem:[%s1382 + $0x2] sm:$0xff]
  %v1400 = vld [vmem:[%s1382 + $0x12] sm:$0xff]
  %v1401 = vld [vmem:[%s1382 + $0x22] sm:$0xff]
  %v1402 = vld [vmem:[%s1382 + $0x32] sm:$0xff]
  %v1403 = vld [vmem:[%s1382 + $0x42] sm:$0xff]
  %v1404 = vld [vmem:[%s1382 + $0x52] sm:$0xff]
  %v1405 = vld [vmem:[%s1382 + $0x62] sm:$0xff]
  %v1406 = vld [vmem:[%s1382 + $0x72] sm:$0xff]
  %1415 = vrot.lane.b32.xlu0 %v1342, 8
  %v1416 = vpop.permute.xlu0 %1415
  %1417 = vrot.lane.b32.xlu0 %v1343, 8
  %v1418 = vpop.permute.xlu0 %1417
  %1419 = vrot.lane.b32.xlu0 %v1344, 8
  %v1420 = vpop.permute.xlu0 %1419
  %1421 = vrot.lane.b32.xlu0 %v1345, 8
  %v1422 = vpop.permute.xlu0 %1421
  %1423 = vrot.lane.b32.xlu0 %v1346, 8
  %v1424 = vpop.permute.xlu0 %1423
  %1425 = vrot.lane.b32.xlu0 %v1347, 8
  %v1426 = vpop.permute.xlu0 %1425
  %1427 = vrot.lane.b32.xlu0 %v1348, 8
  %v1428 = vpop.permute.xlu0 %1427
  %1429 = vrot.lane.b32.xlu0 %v1349, 8
  %v1430 = vpop.permute.xlu0 %1429
  %1447 = vrot.lane.b32.xlu0 %v1350, 16
  %v1448 = vpop.permute.xlu0 %1447
  %1449 = vrot.lane.b32.xlu0 %v1351, 16
  %v1450 = vpop.permute.xlu0 %1449
  %1451 = vrot.lane.b32.xlu0 %v1352, 16
  %v1452 = vpop.permute.xlu0 %1451
  %1453 = vrot.lane.b32.xlu0 %v1353, 16
  %v1454 = vpop.permute.xlu0 %1453
  %1455 = vrot.lane.b32.xlu0 %v1354, 16
  %v1456 = vpop.permute.xlu0 %1455
  %1457 = vrot.lane.b32.xlu0 %v1355, 16
  %v1458 = vpop.permute.xlu0 %1457
  %1459 = vrot.lane.b32.xlu0 %v1356, 16
  %v1460 = vpop.permute.xlu0 %1459
  %1461 = vrot.lane.b32.xlu0 %v1357, 16
  %v1462 = vpop.permute.xlu0 %1461
  %1479 = vrot.lane.b32.xlu0 %v1358, 24
  %v1480 = vpop.permute.xlu0 %1479
  %1481 = vrot.lane.b32.xlu0 %v1359, 24
  %v1482 = vpop.permute.xlu0 %1481
  %1483 = vrot.lane.b32.xlu0 %v1360, 24
  %v1484 = vpop.permute.xlu0 %1483
  %1485 = vrot.lane.b32.xlu0 %v1361, 24
  %v1486 = vpop.permute.xlu0 %1485
  %1487 = vrot.lane.b32.xlu0 %v1362, 24
  %v1488 = vpop.permute.xlu0 %1487
  %1489 = vrot.lane.b32.xlu0 %v1363, 24
  %v1490 = vpop.permute.xlu0 %1489
  %1491 = vrot.lane.b32.xlu0 %v1364, 24
  %v1492 = vpop.permute.xlu0 %1491
  %1493 = vrot.lane.b32.xlu0 %v1365, 24
  %v1494 = vpop.permute.xlu0 %1493
  %1511 = vrot.lane.b32.xlu0 %v1366, 32
  %v1512 = vpop.permute.xlu0 %1511
  %1513 = vrot.lane.b32.xlu0 %v1367, 32
  %v1514 = vpop.permute.xlu0 %1513
  %1515 = vrot.lane.b32.xlu0 %v1368, 32
  %v1516 = vpop.permute.xlu0 %1515
  %1517 = vrot.lane.b32.xlu0 %v1369, 32
  %v1518 = vpop.permute.xlu0 %1517
  %1519 = vrot.lane.b32.xlu0 %v1370, 32
  %v1520 = vpop.permute.xlu0 %1519
  %1521 = vrot.lane.b32.xlu0 %v1371, 32
  %v1522 = vpop.permute.xlu0 %1521
  %1523 = vrot.lane.b32.xlu0 %v1372, 32
  %v1524 = vpop.permute.xlu0 %1523
  %1525 = vrot.lane.b32.xlu0 %v1373, 32
  %v1526 = vpop.permute.xlu0 %1525
  %1543 = vrot.lane.b32.xlu0 %v1374, 40
  %v1544 = vpop.permute.xlu0 %1543
  %1545 = vrot.lane.b32.xlu0 %v1375, 40
  %v1546 = vpop.permute.xlu0 %1545
  %1547 = vrot.lane.b32.xlu0 %v1376, 40
  %v1548 = vpop.permute.xlu0 %1547
  %1549 = vrot.lane.b32.xlu0 %v1377, 40
  %v1550 = vpop.permute.xlu0 %1549
  %1551 = vrot.lane.b32.xlu0 %v1378, 40
  %v1552 = vpop.permute.xlu0 %1551
  %1553 = vrot.lane.b32.xlu0 %v1379, 40
  %v1554 = vpop.permute.xlu0 %1553
  %1555 = vrot.lane.b32.xlu0 %v1380, 40
  %v1556 = vpop.permute.xlu0 %1555
  %1557 = vrot.lane.b32.xlu0 %v1381, 40
  %v1558 = vpop.permute.xlu0 %1557
  %1575 = vrot.lane.b32.xlu0 %v1383, 48
  %v1576 = vpop.permute.xlu0 %1575
  %1577 = vrot.lane.b32.xlu0 %v1384, 48
  %v1578 = vpop.permute.xlu0 %1577
  %1579 = vrot.lane.b32.xlu0 %v1385, 48
  %v1580 = vpop.permute.xlu0 %1579
  %1581 = vrot.lane.b32.xlu0 %v1386, 48
  %v1582 = vpop.permute.xlu0 %1581
  %1583 = vrot.lane.b32.xlu0 %v1387, 48
  %v1584 = vpop.permute.xlu0 %1583
  %1585 = vrot.lane.b32.xlu0 %v1388, 48
  %v1586 = vpop.permute.xlu0 %1585
  %1587 = vrot.lane.b32.xlu0 %v1389, 48
  %v1588 = vpop.permute.xlu0 %1587
  %1589 = vrot.lane.b32.xlu0 %v1390, 48
  %v1590 = vpop.permute.xlu0 %1589
  %1607 = vrot.lane.b32.xlu0 %v1391, 56
  %v1608 = vpop.permute.xlu0 %1607
  %1609 = vrot.lane.b32.xlu0 %v1392, 56
  %v1610 = vpop.permute.xlu0 %1609
  %1611 = vrot.lane.b32.xlu0 %v1393, 56
  %v1612 = vpop.permute.xlu0 %1611
  %1613 = vrot.lane.b32.xlu0 %v1394, 56
  %v1614 = vpop.permute.xlu0 %1613
  %1615 = vrot.lane.b32.xlu0 %v1395, 56
  %v1616 = vpop.permute.xlu0 %1615
  %1617 = vrot.lane.b32.xlu0 %v1396, 56
  %v1618 = vpop.permute.xlu0 %1617
  %1619 = vrot.lane.b32.xlu0 %v1397, 56
  %v1620 = vpop.permute.xlu0 %1619
  %1621 = vrot.lane.b32.xlu0 %v1398, 56
  %v1622 = vpop.permute.xlu0 %1621
  %1639 = vrot.lane.b32.xlu0 %v1399, 64
  %v1640 = vpop.permute.xlu0 %1639
  %1641 = vrot.lane.b32.xlu0 %v1400, 64
  %v1642 = vpop.permute.xlu0 %1641
  %1643 = vrot.lane.b32.xlu0 %v1401, 64
  %v1644 = vpop.permute.xlu0 %1643
  %1645 = vrot.lane.b32.xlu0 %v1402, 64
  %v1646 = vpop.permute.xlu0 %1645
  %1647 = vrot.lane.b32.xlu0 %v1403, 64
  %v1648 = vpop.permute.xlu0 %1647
  %1649 = vrot.lane.b32.xlu0 %v1404, 64
  %v1650 = vpop.permute.xlu0 %1649
  %1651 = vrot.lane.b32.xlu0 %v1405, 64
  %v1652 = vpop.permute.xlu0 %1651
  %1653 = vrot.lane.b32.xlu0 %v1406, 64
  %v1654 = vpop.permute.xlu0 %1653
  %v1663 = vsel %vm55, %v1334, %v1416
  %v1664 = vsel %vm55, %v1335, %v1418
  %v1665 = vsel %vm55, %v1336, %v1420
  %v1666 = vsel %vm55, %v1337, %v1422
  %v1667 = vsel %vm55, %v1338, %v1424
  %v1668 = vsel %vm55, %v1339, %v1426
  %v1669 = vsel %vm55, %v1340, %v1428
  %v1670 = vsel %vm55, %v1341, %v1430
  %v1671 = vsel %vm496, %v1663, %v1448
  %v1672 = vsel %vm496, %v1664, %v1450
  %v1673 = vsel %vm496, %v1665, %v1452
  %v1674 = vsel %vm496, %v1666, %v1454
  %v1675 = vsel %vm496, %v1667, %v1456
  %v1676 = vsel %vm496, %v1668, %v1458
  %v1677 = vsel %vm496, %v1669, %v1460
  %v1678 = vsel %vm496, %v1670, %v1462
  %v1679 = vsel %vm514, %v1671, %v1480
  %v1680 = vsel %vm514, %v1672, %v1482
  %v1681 = vsel %vm514, %v1673, %v1484
  %v1682 = vsel %vm514, %v1674, %v1486
  %v1683 = vsel %vm514, %v1675, %v1488
  %v1684 = vsel %vm514, %v1676, %v1490
  %v1685 = vsel %vm514, %v1677, %v1492
  %v1686 = vsel %vm514, %v1678, %v1494
  %v1687 = vsel %vm532, %v1679, %v1512
  %v1688 = vsel %vm532, %v1680, %v1514
  %v1689 = vsel %vm532, %v1681, %v1516
  %v1690 = vsel %vm532, %v1682, %v1518
  %v1691 = vsel %vm532, %v1683, %v1520
  %v1692 = vsel %vm532, %v1684, %v1522
  %v1693 = vsel %vm532, %v1685, %v1524
  %v1694 = vsel %vm532, %v1686, %v1526
  %vm1695 = vcmask 326656
  %v1696 = vsel %vm1695, %v1687, %v1544
  %v1697 = vsel %vm1695, %v1688, %v1546
  %v1698 = vsel %vm1695, %v1689, %v1548
  %v1699 = vsel %vm1695, %v1690, %v1550
  %v1700 = vsel %vm1695, %v1691, %v1552
  %v1701 = vsel %vm1695, %v1692, %v1554
  %v1702 = vsel %vm1695, %v1693, %v1556
  %v1703 = vsel %vm1695, %v1694, %v1558
  %vm1704 = vcmask 392192
  %v1705 = vsel %vm1704, %v1696, %v1576
  %v1706 = vsel %vm1704, %v1697, %v1578
  %v1707 = vsel %vm1704, %v1698, %v1580
  %v1708 = vsel %vm1704, %v1699, %v1582
  %v1709 = vsel %vm1704, %v1700, %v1584
  %v1710 = vsel %vm1704, %v1701, %v1586
  %v1711 = vsel %vm1704, %v1702, %v1588
  %v1712 = vsel %vm1704, %v1703, %v1590
  %vm1713 = vcmask 457728
  %v1714 = vsel %vm1713, %v1705, %v1608
  %v1715 = vsel %vm1713, %v1706, %v1610
  %v1716 = vsel %vm1713, %v1707, %v1612
  %v1717 = vsel %vm1713, %v1708, %v1614
  %v1718 = vsel %vm1713, %v1709, %v1616
  %v1719 = vsel %vm1713, %v1710, %v1618
  %v1720 = vsel %vm1713, %v1711, %v1620
  %v1721 = vsel %vm1713, %v1712, %v1622
  %vm1722 = vcmask 523264
  %v1723 = vsel %vm1722, %v1714, %v1640
  %v1724 = vsel %vm1722, %v1715, %v1642
  %v1725 = vsel %vm1722, %v1716, %v1644
  %v1726 = vsel %vm1722, %v1717, %v1646
  %v1727 = vsel %vm1722, %v1718, %v1648
  %v1728 = vsel %vm1722, %v1719, %v1650
  %v1729 = vsel %vm1722, %v1720, %v1652
  %v1730 = vsel %vm1722, %v1721, %v1654
  %v1731 = vpack.c.bf16 %v1724, %v1723
  %v1732 = vpack.c.bf16 %v1726, %v1725
  %v1733 = vpack.c.bf16 %v1728, %v1727
  %v1734 = vpack.c.bf16 %v1730, %v1729
  %v1735 = vld [vmem:[%s5] sm:$0xf]
  %v1736 = vld [vmem:[%s5 + $0x4] sm:$0xf]
  %v1737 = vld [vmem:[%s5 + $0x8] sm:$0xf]
  %v1738 = vld [vmem:[%s5 + $0xc] sm:$0xf]
  %v1739 = vld [vmem:[%s5 + $0x10] sm:$0xf]
  %v1740 = vld [vmem:[%s5 + $0x14] sm:$0xf]
  %v1741 = vld [vmem:[%s5 + $0x18] sm:$0xf]
  %v1742 = vld [vmem:[%s5 + $0x1c] sm:$0xf]
  %v1743 = vld [vmem:[%s5 + $0x20] sm:$0xf]
  %v1744 = vld [vmem:[%s6] sm:$0x1]
  %v1746 = vperm.slane %v1744, 0
  %v1757 = vunpack.c.l.b16 %v1735
  %v1758 = vunpack.c.l.b16 %v1736
  %v1759 = vunpack.c.l.b16 %v1737
  %v1760 = vunpack.c.l.b16 %v1738
  %v1761 = vunpack.c.l.b16 %v1739
  %v1762 = vunpack.c.l.b16 %v1740
  %v1763 = vunpack.c.l.b16 %v1741
  %v1764 = vunpack.c.l.b16 %v1742
  %v1765 = vunpack.c.l.b16 %v1743
  %v1766 = vpack.c.b16 %v1758, %v1757
  %v1767 = vpack.c.b16 %v1760, %v1759
  %v1768 = vpack.c.b16 %v1762, %v1761
  %v1769 = vpack.c.b16 %v1764, %v1763
  %v1770 = vpack.c.b16 %v1765, %v1765
  %vm1775 = vcmask 588800
  %v1777 = vsel %vm1775, %v1731, 0
  %v1780 = vsel %vm1775, %v1732, 0
  %v1783 = vsel %vm1775, %v1733, 0
  %v1786 = vsel %vm1775, %v1734, 0
  %vm1788 = vcmask 1043456
  %v1790 = vsel %vm1788, %v1770, 0
  %1792 = vmatpush.bf16.msra.mxu0 0
  %1793 = vmatpush.bf16.msra.mxu0 0
  %1794 = vmatpush.bf16.msra.mxu0 0
  %1795 = vmatpush.bf16.msra.mxu0 %v1790
  %1796 = vmatpush.bf16.msra.mxu0 %v1769
  %1797 = vmatpush.bf16.msra.mxu0 %v1768
  %1798 = vmatpush.bf16.msra.mxu0 %v1767
  %1799 = vmatpush.bf16.msra.mxu0 %v1766
  %1800 = vmatmul.bf16.gmra.mxu0 %v1777
  %v1801 = vpop.f32.mrf.mxu0
  %v1802 = vadd.f32 %v1746, %v1801
  %v1803 = vpop.f32.mrf.mxu0
  %v1804 = vadd.f32 %v1746, %v1803
  %1805 = vmatmul.bf16.gmra.mxu0 %v1780
  %v1806 = vpop.f32.mrf.mxu0
  %v1807 = vadd.f32 %v1746, %v1806
  %v1808 = vpop.f32.mrf.mxu0
  %v1809 = vadd.f32 %v1746, %v1808
  %1810 = vmatmul.bf16.gmra.mxu0 %v1783
  %v1811 = vpop.f32.mrf.mxu0
  %v1812 = vadd.f32 %v1746, %v1811
  %v1813 = vpop.f32.mrf.mxu0
  %v1814 = vadd.f32 %v1746, %v1813
  %1815 = vmatmul.bf16.gmra.mxu0 %v1786
  %v1816 = vpop.f32.mrf.mxu0
  %v1817 = vadd.f32 %v1746, %v1816
  %v1818 = vpop.f32.mrf.mxu0
  %v1819 = vadd.f32 %v1746, %v1818
  %1820 = vdwg.mxu0
  %1821 = vst.msk [vmem:[%s9] sm:$0xff] %vm55, %v1802
  %1822 = vst.msk [vmem:[%s9 + $0x8] sm:$0xff] %vm55, %v1804
  %1823 = vst.msk [vmem:[%s9 + $0x10] sm:$0xff] %vm55, %v1807
  %1824 = vst.msk [vmem:[%s9 + $0x18] sm:$0xff] %vm55, %v1809
  %1825 = vst.msk [vmem:[%s9 + $0x20] sm:$0xff] %vm55, %v1812
  %1826 = vst.msk [vmem:[%s9 + $0x28] sm:$0xff] %vm55, %v1814
  %1827 = vst.msk [vmem:[%s9 + $0x30] sm:$0xff] %vm55, %v1817
  %1828 = vst.msk [vmem:[%s9 + $0x38] sm:$0xff] %vm55, %v1819
  %v1829 = vld [vmem:[%s1152] sm:$0xff]
  %v1830 = vld [vmem:[%s1152 + $0x8] sm:$0xff]
  %v1831 = vld [vmem:[%s1152 + $0x10] sm:$0xff]
  %v1832 = vld [vmem:[%s1152 + $0x18] sm:$0xff]
  %v1833 = vld [vmem:[%s1152 + $0x20] sm:$0xff]
  %v1834 = vld [vmem:[%s1152 + $0x28] sm:$0xff]
  %v1835 = vld [vmem:[%s1152 + $0x30] sm:$0xff]
  %v1836 = vld [vmem:[%s1152 + $0x38] sm:$0xff]
  %v1837 = vmul.f32 %v1829, %v1296
  %v1838 = vmul.f32 %v1830, %v1296
  %v1839 = vmul.f32 %v1831, %v1296
  %v1840 = vmul.f32 %v1832, %v1296
  %v1841 = vmul.f32 %v1833, %v1296
  %v1842 = vmul.f32 %v1834, %v1296
  %v1843 = vmul.f32 %v1835, %v1296
  %v1844 = vmul.f32 %v1836, %v1296
  %v1845 = vadd.f32 %v1837, %v1307
  %v1846 = vadd.f32 %v1838, %v1307
  %v1847 = vadd.f32 %v1839, %v1307
  %v1848 = vadd.f32 %v1840, %v1307
  %v1849 = vadd.f32 %v1841, %v1307
  %v1850 = vadd.f32 %v1842, %v1307
  %v1851 = vadd.f32 %v1843, %v1307
  %v1852 = vadd.f32 %v1844, %v1307
  %v1853 = vmax.f32 %v1845, 0.0
  %v1854 = vmax.f32 %v1846, 0.0
  %v1855 = vmax.f32 %v1847, 0.0
  %v1856 = vmax.f32 %v1848, 0.0
  %v1857 = vmax.f32 %v1849, 0.0
  %v1858 = vmax.f32 %v1850, 0.0
  %v1859 = vmax.f32 %v1851, 0.0
  %v1860 = vmax.f32 %v1852, 0.0
  %1861 = vst.msk [vmem:[%s1325 + $0x1] sm:$0xff] %vm55, %v1853
  %1862 = vst.msk [vmem:[%s1325 + $0x11] sm:$0xff] %vm55, %v1854
  %1863 = vst.msk [vmem:[%s1325 + $0x21] sm:$0xff] %vm55, %v1855
  %1864 = vst.msk [vmem:[%s1325 + $0x31] sm:$0xff] %vm55, %v1856
  %1865 = vst.msk [vmem:[%s1325 + $0x41] sm:$0xff] %vm55, %v1857
  %1866 = vst.msk [vmem:[%s1325 + $0x51] sm:$0xff] %vm55, %v1858
  %1867 = vst.msk [vmem:[%s1325 + $0x61] sm:$0xff] %vm55, %v1859
  %1868 = vst.msk [vmem:[%s1325 + $0x71] sm:$0xff] %vm55, %v1860
  %v1869 = vld [vmem:[#allocation3] sm:$0xff]
  %v1870 = vld [vmem:[#allocation3 + $0x10] sm:$0xff]
  %v1871 = vld [vmem:[#allocation3 + $0x20] sm:$0xff]
  %v1872 = vld [vmem:[#allocation3 + $0x30] sm:$0xff]
  %v1873 = vld [vmem:[#allocation3 + $0x40] sm:$0xff]
  %v1874 = vld [vmem:[#allocation3 + $0x50] sm:$0xff]
  %v1875 = vld [vmem:[#allocation3 + $0x60] sm:$0xff]
  %v1876 = vld [vmem:[#allocation3 + $0x70] sm:$0xff]
  %v1877 = vld [vmem:[#allocation3 + $0x1] sm:$0xff]
  %v1878 = vld [vmem:[#allocation3 + $0x11] sm:$0xff]
  %v1879 = vld [vmem:[#allocation3 + $0x21] sm:$0xff]
  %v1880 = vld [vmem:[#allocation3 + $0x31] sm:$0xff]
  %v1881 = vld [vmem:[#allocation3 + $0x41] sm:$0xff]
  %v1882 = vld [vmem:[#allocation3 + $0x51] sm:$0xff]
  %v1883 = vld [vmem:[#allocation3 + $0x61] sm:$0xff]
  %v1884 = vld [vmem:[#allocation3 + $0x71] sm:$0xff]
  %v1885 = vld [vmem:[#allocation3 + $0x2] sm:$0xff]
  %v1886 = vld [vmem:[#allocation3 + $0x12] sm:$0xff]
  %v1887 = vld [vmem:[#allocation3 + $0x22] sm:$0xff]
  %v1888 = vld [vmem:[#allocation3 + $0x32] sm:$0xff]
  %v1889 = vld [vmem:[#allocation3 + $0x42] sm:$0xff]
  %v1890 = vld [vmem:[#allocation3 + $0x52] sm:$0xff]
  %v1891 = vld [vmem:[#allocation3 + $0x62] sm:$0xff]
  %v1892 = vld [vmem:[#allocation3 + $0x72] sm:$0xff]
  %v1893 = vld [vmem:[%s1325] sm:$0xff]
  %v1894 = vld [vmem:[%s1325 + $0x10] sm:$0xff]
  %v1895 = vld [vmem:[%s1325 + $0x20] sm:$0xff]
  %v1896 = vld [vmem:[%s1325 + $0x30] sm:$0xff]
  %v1897 = vld [vmem:[%s1325 + $0x40] sm:$0xff]
  %v1898 = vld [vmem:[%s1325 + $0x50] sm:$0xff]
  %v1899 = vld [vmem:[%s1325 + $0x60] sm:$0xff]
  %v1900 = vld [vmem:[%s1325 + $0x70] sm:$0xff]
  %v1901 = vld [vmem:[%s1325 + $0x1] sm:$0xff]
  %v1902 = vld [vmem:[%s1325 + $0x11] sm:$0xff]
  %v1903 = vld [vmem:[%s1325 + $0x21] sm:$0xff]
  %v1904 = vld [vmem:[%s1325 + $0x31] sm:$0xff]
  %v1905 = vld [vmem:[%s1325 + $0x41] sm:$0xff]
  %v1906 = vld [vmem:[%s1325 + $0x51] sm:$0xff]
  %v1907 = vld [vmem:[%s1325 + $0x61] sm:$0xff]
  %v1908 = vld [vmem:[%s1325 + $0x71] sm:$0xff]
  %v1909 = vld [vmem:[%s1325 + $0x2] sm:$0xff]
  %v1910 = vld [vmem:[%s1325 + $0x12] sm:$0xff]
  %v1911 = vld [vmem:[%s1325 + $0x22] sm:$0xff]
  %v1912 = vld [vmem:[%s1325 + $0x32] sm:$0xff]
  %v1913 = vld [vmem:[%s1325 + $0x42] sm:$0xff]
  %v1914 = vld [vmem:[%s1325 + $0x52] sm:$0xff]
  %v1915 = vld [vmem:[%s1325 + $0x62] sm:$0xff]
  %v1916 = vld [vmem:[%s1325 + $0x72] sm:$0xff]
  %v1917 = vld [vmem:[%s1382] sm:$0xff]
  %v1918 = vld [vmem:[%s1382 + $0x10] sm:$0xff]
  %v1919 = vld [vmem:[%s1382 + $0x20] sm:$0xff]
  %v1920 = vld [vmem:[%s1382 + $0x30] sm:$0xff]
  %v1921 = vld [vmem:[%s1382 + $0x40] sm:$0xff]
  %v1922 = vld [vmem:[%s1382 + $0x50] sm:$0xff]
  %v1923 = vld [vmem:[%s1382 + $0x60] sm:$0xff]
  %v1924 = vld [vmem:[%s1382 + $0x70] sm:$0xff]
  %v1925 = vld [vmem:[%s1382 + $0x1] sm:$0xff]
  %v1926 = vld [vmem:[%s1382 + $0x11] sm:$0xff]
  %v1927 = vld [vmem:[%s1382 + $0x21] sm:$0xff]
  %v1928 = vld [vmem:[%s1382 + $0x31] sm:$0xff]
  %v1929 = vld [vmem:[%s1382 + $0x41] sm:$0xff]
  %v1930 = vld [vmem:[%s1382 + $0x51] sm:$0xff]
  %v1931 = vld [vmem:[%s1382 + $0x61] sm:$0xff]
  %v1932 = vld [vmem:[%s1382 + $0x71] sm:$0xff]
  %v1933 = vld [vmem:[%s1382 + $0x2] sm:$0xff]
  %v1934 = vld [vmem:[%s1382 + $0x12] sm:$0xff]
  %v1935 = vld [vmem:[%s1382 + $0x22] sm:$0xff]
  %v1936 = vld [vmem:[%s1382 + $0x32] sm:$0xff]
  %v1937 = vld [vmem:[%s1382 + $0x42] sm:$0xff]
  %v1938 = vld [vmem:[%s1382 + $0x52] sm:$0xff]
  %v1939 = vld [vmem:[%s1382 + $0x62] sm:$0xff]
  %v1940 = vld [vmem:[%s1382 + $0x72] sm:$0xff]
  %1949 = vrot.lane.b32.xlu0 %v1877, 8
  %v1950 = vpop.permute.xlu0 %1949
  %1951 = vrot.lane.b32.xlu0 %v1878, 8
  %v1952 = vpop.permute.xlu0 %1951
  %1953 = vrot.lane.b32.xlu0 %v1879, 8
  %v1954 = vpop.permute.xlu0 %1953
  %1955 = vrot.lane.b32.xlu0 %v1880, 8
  %v1956 = vpop.permute.xlu0 %1955
  %1957 = vrot.lane.b32.xlu0 %v1881, 8
  %v1958 = vpop.permute.xlu0 %1957
  %1959 = vrot.lane.b32.xlu0 %v1882, 8
  %v1960 = vpop.permute.xlu0 %1959
  %1961 = vrot.lane.b32.xlu0 %v1883, 8
  %v1962 = vpop.permute.xlu0 %1961
  %1963 = vrot.lane.b32.xlu0 %v1884, 8
  %v1964 = vpop.permute.xlu0 %1963
  %1981 = vrot.lane.b32.xlu0 %v1885, 16
  %v1982 = vpop.permute.xlu0 %1981
  %1983 = vrot.lane.b32.xlu0 %v1886, 16
  %v1984 = vpop.permute.xlu0 %1983
  %1985 = vrot.lane.b32.xlu0 %v1887, 16
  %v1986 = vpop.permute.xlu0 %1985
  %1987 = vrot.lane.b32.xlu0 %v1888, 16
  %v1988 = vpop.permute.xlu0 %1987
  %1989 = vrot.lane.b32.xlu0 %v1889, 16
  %v1990 = vpop.permute.xlu0 %1989
  %1991 = vrot.lane.b32.xlu0 %v1890, 16
  %v1992 = vpop.permute.xlu0 %1991
  %1993 = vrot.lane.b32.xlu0 %v1891, 16
  %v1994 = vpop.permute.xlu0 %1993
  %1995 = vrot.lane.b32.xlu0 %v1892, 16
  %v1996 = vpop.permute.xlu0 %1995
  %2013 = vrot.lane.b32.xlu0 %v1893, 24
  %v2014 = vpop.permute.xlu0 %2013
  %2015 = vrot.lane.b32.xlu0 %v1894, 24
  %v2016 = vpop.permute.xlu0 %2015
  %2017 = vrot.lane.b32.xlu0 %v1895, 24
  %v2018 = vpop.permute.xlu0 %2017
  %2019 = vrot.lane.b32.xlu0 %v1896, 24
  %v2020 = vpop.permute.xlu0 %2019
  %2021 = vrot.lane.b32.xlu0 %v1897, 24
  %v2022 = vpop.permute.xlu0 %2021
  %2023 = vrot.lane.b32.xlu0 %v1898, 24
  %v2024 = vpop.permute.xlu0 %2023
  %2025 = vrot.lane.b32.xlu0 %v1899, 24
  %v2026 = vpop.permute.xlu0 %2025
  %2027 = vrot.lane.b32.xlu0 %v1900, 24
  %v2028 = vpop.permute.xlu0 %2027
  %2045 = vrot.lane.b32.xlu0 %v1901, 32
  %v2046 = vpop.permute.xlu0 %2045
  %2047 = vrot.lane.b32.xlu0 %v1902, 32
  %v2048 = vpop.permute.xlu0 %2047
  %2049 = vrot.lane.b32.xlu0 %v1903, 32
  %v2050 = vpop.permute.xlu0 %2049
  %2051 = vrot.lane.b32.xlu0 %v1904, 32
  %v2052 = vpop.permute.xlu0 %2051
  %2053 = vrot.lane.b32.xlu0 %v1905, 32
  %v2054 = vpop.permute.xlu0 %2053
  %2055 = vrot.lane.b32.xlu0 %v1906, 32
  %v2056 = vpop.permute.xlu0 %2055
  %2057 = vrot.lane.b32.xlu0 %v1907, 32
  %v2058 = vpop.permute.xlu0 %2057
  %2059 = vrot.lane.b32.xlu0 %v1908, 32
  %v2060 = vpop.permute.xlu0 %2059
  %2077 = vrot.lane.b32.xlu0 %v1909, 40
  %v2078 = vpop.permute.xlu0 %2077
  %2079 = vrot.lane.b32.xlu0 %v1910, 40
  %v2080 = vpop.permute.xlu0 %2079
  %2081 = vrot.lane.b32.xlu0 %v1911, 40
  %v2082 = vpop.permute.xlu0 %2081
  %2083 = vrot.lane.b32.xlu0 %v1912, 40
  %v2084 = vpop.permute.xlu0 %2083
  %2085 = vrot.lane.b32.xlu0 %v1913, 40
  %v2086 = vpop.permute.xlu0 %2085
  %2087 = vrot.lane.b32.xlu0 %v1914, 40
  %v2088 = vpop.permute.xlu0 %2087
  %2089 = vrot.lane.b32.xlu0 %v1915, 40
  %v2090 = vpop.permute.xlu0 %2089
  %2091 = vrot.lane.b32.xlu0 %v1916, 40
  %v2092 = vpop.permute.xlu0 %2091
  %2109 = vrot.lane.b32.xlu0 %v1917, 48
  %v2110 = vpop.permute.xlu0 %2109
  %2111 = vrot.lane.b32.xlu0 %v1918, 48
  %v2112 = vpop.permute.xlu0 %2111
  %2113 = vrot.lane.b32.xlu0 %v1919, 48
  %v2114 = vpop.permute.xlu0 %2113
  %2115 = vrot.lane.b32.xlu0 %v1920, 48
  %v2116 = vpop.permute.xlu0 %2115
  %2117 = vrot.lane.b32.xlu0 %v1921, 48
  %v2118 = vpop.permute.xlu0 %2117
  %2119 = vrot.lane.b32.xlu0 %v1922, 48
  %v2120 = vpop.permute.xlu0 %2119
  %2121 = vrot.lane.b32.xlu0 %v1923, 48
  %v2122 = vpop.permute.xlu0 %2121
  %2123 = vrot.lane.b32.xlu0 %v1924, 48
  %v2124 = vpop.permute.xlu0 %2123
  %2141 = vrot.lane.b32.xlu0 %v1925, 56
  %v2142 = vpop.permute.xlu0 %2141
  %2143 = vrot.lane.b32.xlu0 %v1926, 56
  %v2144 = vpop.permute.xlu0 %2143
  %2145 = vrot.lane.b32.xlu0 %v1927, 56
  %v2146 = vpop.permute.xlu0 %2145
  %2147 = vrot.lane.b32.xlu0 %v1928, 56
  %v2148 = vpop.permute.xlu0 %2147
  %2149 = vrot.lane.b32.xlu0 %v1929, 56
  %v2150 = vpop.permute.xlu0 %2149
  %2151 = vrot.lane.b32.xlu0 %v1930, 56
  %v2152 = vpop.permute.xlu0 %2151
  %2153 = vrot.lane.b32.xlu0 %v1931, 56
  %v2154 = vpop.permute.xlu0 %2153
  %2155 = vrot.lane.b32.xlu0 %v1932, 56
  %v2156 = vpop.permute.xlu0 %2155
  %2173 = vrot.lane.b32.xlu0 %v1933, 64
  %v2174 = vpop.permute.xlu0 %2173
  %2175 = vrot.lane.b32.xlu0 %v1934, 64
  %v2176 = vpop.permute.xlu0 %2175
  %2177 = vrot.lane.b32.xlu0 %v1935, 64
  %v2178 = vpop.permute.xlu0 %2177
  %2179 = vrot.lane.b32.xlu0 %v1936, 64
  %v2180 = vpop.permute.xlu0 %2179
  %2181 = vrot.lane.b32.xlu0 %v1937, 64
  %v2182 = vpop.permute.xlu0 %2181
  %2183 = vrot.lane.b32.xlu0 %v1938, 64
  %v2184 = vpop.permute.xlu0 %2183
  %2185 = vrot.lane.b32.xlu0 %v1939, 64
  %v2186 = vpop.permute.xlu0 %2185
  %2187 = vrot.lane.b32.xlu0 %v1940, 64
  %v2188 = vpop.permute.xlu0 %2187
  %v2197 = vsel %vm55, %v1869, %v1950
  %v2198 = vsel %vm55, %v1870, %v1952
  %v2199 = vsel %vm55, %v1871, %v1954
  %v2200 = vsel %vm55, %v1872, %v1956
  %v2201 = vsel %vm55, %v1873, %v1958
  %v2202 = vsel %vm55, %v1874, %v1960
  %v2203 = vsel %vm55, %v1875, %v1962
  %v2204 = vsel %vm55, %v1876, %v1964
  %v2205 = vsel %vm496, %v2197, %v1982
  %v2206 = vsel %vm496, %v2198, %v1984
  %v2207 = vsel %vm496, %v2199, %v1986
  %v2208 = vsel %vm496, %v2200, %v1988
  %v2209 = vsel %vm496, %v2201, %v1990
  %v2210 = vsel %vm496, %v2202, %v1992
  %v2211 = vsel %vm496, %v2203, %v1994
  %v2212 = vsel %vm496, %v2204, %v1996
  %v2213 = vsel %vm514, %v2205, %v2014
  %v2214 = vsel %vm514, %v2206, %v2016
  %v2215 = vsel %vm514, %v2207, %v2018
  %v2216 = vsel %vm514, %v2208, %v2020
  %v2217 = vsel %vm514, %v2209, %v2022
  %v2218 = vsel %vm514, %v2210, %v2024
  %v2219 = vsel %vm514, %v2211, %v2026
  %v2220 = vsel %vm514, %v2212, %v2028
  %v2221 = vsel %vm532, %v2213, %v2046
  %v2222 = vsel %vm532, %v2214, %v2048
  %v2223 = vsel %vm532, %v2215, %v2050
  %v2224 = vsel %vm532, %v2216, %v2052
  %v2225 = vsel %vm532, %v2217, %v2054
  %v2226 = vsel %vm532, %v2218, %v2056
  %v2227 = vsel %vm532, %v2219, %v2058
  %v2228 = vsel %vm532, %v2220, %v2060
  %v2229 = vsel %vm1695, %v2221, %v2078
  %v2230 = vsel %vm1695, %v2222, %v2080
  %v2231 = vsel %vm1695, %v2223, %v2082
  %v2232 = vsel %vm1695, %v2224, %v2084
  %v2233 = vsel %vm1695, %v2225, %v2086
  %v2234 = vsel %vm1695, %v2226, %v2088
  %v2235 = vsel %vm1695, %v2227, %v2090
  %v2236 = vsel %vm1695, %v2228, %v2092
  %v2237 = vsel %vm1704, %v2229, %v2110
  %v2238 = vsel %vm1704, %v2230, %v2112
  %v2239 = vsel %vm1704, %v2231, %v2114
  %v2240 = vsel %vm1704, %v2232, %v2116
  %v2241 = vsel %vm1704, %v2233, %v2118
  %v2242 = vsel %vm1704, %v2234, %v2120
  %v2243 = vsel %vm1704, %v2235, %v2122
  %v2244 = vsel %vm1704, %v2236, %v2124
  %v2245 = vsel %vm1713, %v2237, %v2142
  %v2246 = vsel %vm1713, %v2238, %v2144
  %v2247 = vsel %vm1713, %v2239, %v2146
  %v2248 = vsel %vm1713, %v2240, %v2148
  %v2249 = vsel %vm1713, %v2241, %v2150
  %v2250 = vsel %vm1713, %v2242, %v2152
  %v2251 = vsel %vm1713, %v2243, %v2154
  %v2252 = vsel %vm1713, %v2244, %v2156
  %v2253 = vsel %vm1722, %v2245, %v2174
  %v2254 = vsel %vm1722, %v2246, %v2176
  %v2255 = vsel %vm1722, %v2247, %v2178
  %v2256 = vsel %vm1722, %v2248, %v2180
  %v2257 = vsel %vm1722, %v2249, %v2182
  %v2258 = vsel %vm1722, %v2250, %v2184
  %v2259 = vsel %vm1722, %v2251, %v2186
  %v2260 = vsel %vm1722, %v2252, %v2188
  %v2261 = vpack.c.bf16 %v2254, %v2253
  %v2262 = vpack.c.bf16 %v2256, %v2255
  %v2263 = vpack.c.bf16 %v2258, %v2257
  %v2264 = vpack.c.bf16 %v2260, %v2259
  %v2265 = vld [vmem:[%s5] sm:$0xf]
  %v2266 = vld [vmem:[%s5 + $0x4] sm:$0xf]
  %v2267 = vld [vmem:[%s5 + $0x8] sm:$0xf]
  %v2268 = vld [vmem:[%s5 + $0xc] sm:$0xf]
  %v2269 = vld [vmem:[%s5 + $0x10] sm:$0xf]
  %v2270 = vld [vmem:[%s5 + $0x14] sm:$0xf]
  %v2271 = vld [vmem:[%s5 + $0x18] sm:$0xf]
  %v2272 = vld [vmem:[%s5 + $0x1c] sm:$0xf]
  %v2273 = vld [vmem:[%s5 + $0x20] sm:$0xf]
  %v2274 = vld [vmem:[%s6] sm:$0x1]
  %v2276 = vperm.slane %v2274, 0
  %v2287 = vunpack.c.l.b16 %v2265
  %v2288 = vunpack.c.l.b16 %v2266
  %v2289 = vunpack.c.l.b16 %v2267
  %v2290 = vunpack.c.l.b16 %v2268
  %v2291 = vunpack.c.l.b16 %v2269
  %v2292 = vunpack.c.l.b16 %v2270
  %v2293 = vunpack.c.l.b16 %v2271
  %v2294 = vunpack.c.l.b16 %v2272
  %v2295 = vunpack.c.l.b16 %v2273
  %v2296 = vpack.c.b16 %v2288, %v2287
  %v2297 = vpack.c.b16 %v2290, %v2289
  %v2298 = vpack.c.b16 %v2292, %v2291
  %v2299 = vpack.c.b16 %v2294, %v2293
  %v2300 = vpack.c.b16 %v2295, %v2295
  %v2306 = vsel %vm1775, %v2261, 0
  %v2309 = vsel %vm1775, %v2262, 0
  %v2312 = vsel %vm1775, %v2263, 0
  %v2315 = vsel %vm1775, %v2264, 0
  %v2318 = vsel %vm1788, %v2300, 0
  %2320 = vmatpush.bf16.msra.mxu0 0
  %2321 = vmatpush.bf16.msra.mxu0 0
  %2322 = vmatpush.bf16.msra.mxu0 0
  %2323 = vmatpush.bf16.msra.mxu0 %v2318
  %2324 = vmatpush.bf16.msra.mxu0 %v2299
  %2325 = vmatpush.bf16.msra.mxu0 %v2298
  %2326 = vmatpush.bf16.msra.mxu0 %v2297
  %2327 = vmatpush.bf16.msra.mxu0 %v2296
  %2328 = vmatmul.bf16.gmra.mxu0 %v2306
  %v2329 = vpop.f32.mrf.mxu0
  %v2330 = vadd.f32 %v2276, %v2329
  %v2331 = vpop.f32.mrf.mxu0
  %v2332 = vadd.f32 %v2276, %v2331
  %2333 = vmatmul.bf16.gmra.mxu0 %v2309
  %v2334 = vpop.f32.mrf.mxu0
  %v2335 = vadd.f32 %v2276, %v2334
  %v2336 = vpop.f32.mrf.mxu0
  %v2337 = vadd.f32 %v2276, %v2336
  %2338 = vmatmul.bf16.gmra.mxu0 %v2312
  %v2339 = vpop.f32.mrf.mxu0
  %v2340 = vadd.f32 %v2276, %v2339
  %v2341 = vpop.f32.mrf.mxu0
  %v2342 = vadd.f32 %v2276, %v2341
  %2343 = vmatmul.bf16.gmra.mxu0 %v2315
  %v2344 = vpop.f32.mrf.mxu0
  %v2345 = vadd.f32 %v2276, %v2344
  %v2346 = vpop.f32.mrf.mxu0
  %v2347 = vadd.f32 %v2276, %v2346
  %2348 = vdwg.mxu0
  %s2349 = scalar_lea.vmem %s9, 64
  %2350 = vst.msk [vmem:[%s2349] sm:$0xff] %vm55, %v2330
  %2351 = vst.msk [vmem:[%s2349 + $0x8] sm:$0xff] %vm55, %v2332
  %2352 = vst.msk [vmem:[%s2349 + $0x10] sm:$0xff] %vm55, %v2335
  %2353 = vst.msk [vmem:[%s2349 + $0x18] sm:$0xff] %vm55, %v2337
  %2354 = vst.msk [vmem:[%s2349 + $0x20] sm:$0xff] %vm55, %v2340
  %2355 = vst.msk [vmem:[%s2349 + $0x28] sm:$0xff] %vm55, %v2342
  %2356 = vst.msk [vmem:[%s2349 + $0x30] sm:$0xff] %vm55, %v2345
  %2357 = vst.msk [vmem:[%s2349 + $0x38] sm:$0xff] %vm55, %v2347
  %v2358 = vld [vmem:[%s9] sm:$0xff]
  %v2359 = vld [vmem:[%s9 + $0x8] sm:$0xff]
  %v2360 = vld [vmem:[%s9 + $0x10] sm:$0xff]
  %v2361 = vld [vmem:[%s9 + $0x18] sm:$0xff]
  %v2362 = vld [vmem:[%s9 + $0x20] sm:$0xff]
  %v2363 = vld [vmem:[%s9 + $0x28] sm:$0xff]
  %v2364 = vld [vmem:[%s9 + $0x30] sm:$0xff]
  %v2365 = vld [vmem:[%s9 + $0x38] sm:$0xff]
  %v2366 = vld [vmem:[%s9 + $0x40] sm:$0xff]
  %v2367 = vld [vmem:[%s9 + $0x48] sm:$0xff]
  %v2368 = vld [vmem:[%s9 + $0x50] sm:$0xff]
  %v2369 = vld [vmem:[%s9 + $0x58] sm:$0xff]
  %v2370 = vld [vmem:[%s9 + $0x60] sm:$0xff]
  %v2371 = vld [vmem:[%s9 + $0x68] sm:$0xff]
  %v2372 = vld [vmem:[%s9 + $0x70] sm:$0xff]
  %v2373 = vld [vmem:[%s9 + $0x78] sm:$0xff]
  %v2374 = vsel %vm55, %v2358, 0.0
  %v2375 = vsel %vm55, %v2359, 0.0
  %v2376 = vadd.f32 %v2374, %v2375
  %v2377 = vsel %vm55, %v2360, 0.0
  %v2378 = vadd.f32 %v2376, %v2377
  %v2379 = vsel %vm55, %v2361, 0.0
  %v2380 = vadd.f32 %v2378, %v2379
  %v2381 = vsel %vm55, %v2362, 0.0
  %v2382 = vadd.f32 %v2380, %v2381
  %v2383 = vsel %vm55, %v2363, 0.0
  %v2384 = vadd.f32 %v2382, %v2383
  %v2385 = vsel %vm55, %v2364, 0.0
  %v2386 = vadd.f32 %v2384, %v2385
  %v2387 = vsel %vm55, %v2365, 0.0
  %v2388 = vadd.f32 %v2386, %v2387
  %v2389 = vsel %vm55, %v2366, 0.0
  %v2390 = vadd.f32 %v2388, %v2389
  %v2391 = vsel %vm55, %v2367, 0.0
  %v2392 = vadd.f32 %v2390, %v2391
  %v2393 = vsel %vm55, %v2368, 0.0
  %v2394 = vadd.f32 %v2392, %v2393
  %v2395 = vsel %vm55, %v2369, 0.0
  %v2396 = vadd.f32 %v2394, %v2395
  %v2397 = vsel %vm55, %v2370, 0.0
  %v2398 = vadd.f32 %v2396, %v2397
  %v2399 = vsel %vm55, %v2371, 0.0
  %v2400 = vadd.f32 %v2398, %v2399
  %v2401 = vsel %vm55, %v2372, 0.0
  %v2402 = vadd.f32 %v2400, %v2401
  %v2403 = vsel %vm55, %v2373, 0.0
  %v2404 = vadd.f32 %v2402, %v2403
  %v2405 = vrot.slane %v2404, 4
  %v2406 = vadd.f32 %v2404, %v2405
  %v2407 = vrot.slane %v2406, 2
  %v2408 = vadd.f32 %v2406, %v2407
  %v2409 = vrot.slane %v2408, 1
  %v2410 = vadd.f32 %v2408, %v2409
  %v2411 = vmul.f32 %v2358, %v2358
  %v2412 = vmul.f32 %v2359, %v2359
  %v2413 = vmul.f32 %v2360, %v2360
  %v2414 = vmul.f32 %v2361, %v2361
  %v2415 = vmul.f32 %v2362, %v2362
  %v2416 = vmul.f32 %v2363, %v2363
  %v2417 = vmul.f32 %v2364, %v2364
  %v2418 = vmul.f32 %v2365, %v2365
  %v2419 = vmul.f32 %v2366, %v2366
  %v2420 = vmul.f32 %v2367, %v2367
  %v2421 = vmul.f32 %v2368, %v2368
  %v2422 = vmul.f32 %v2369, %v2369
  %v2423 = vmul.f32 %v2370, %v2370
  %v2424 = vmul.f32 %v2371, %v2371
  %v2425 = vmul.f32 %v2372, %v2372
  %v2426 = vmul.f32 %v2373, %v2373
  %v2427 = vsel %vm55, %v2411, 0.0
  %v2428 = vsel %vm55, %v2412, 0.0
  %v2429 = vadd.f32 %v2427, %v2428
  %v2430 = vsel %vm55, %v2413, 0.0
  %v2431 = vadd.f32 %v2429, %v2430
  %v2432 = vsel %vm55, %v2414, 0.0
  %v2433 = vadd.f32 %v2431, %v2432
  %v2434 = vsel %vm55, %v2415, 0.0
  %v2435 = vadd.f32 %v2433, %v2434
  %v2436 = vsel %vm55, %v2416, 0.0
  %v2437 = vadd.f32 %v2435, %v2436
  %v2438 = vsel %vm55, %v2417, 0.0
  %v2439 = vadd.f32 %v2437, %v2438
  %v2440 = vsel %vm55, %v2418, 0.0
  %v2441 = vadd.f32 %v2439, %v2440
  %v2442 = vsel %vm55, %v2419, 0.0
  %v2443 = vadd.f32 %v2441, %v2442
  %v2444 = vsel %vm55, %v2420, 0.0
  %v2445 = vadd.f32 %v2443, %v2444
  %v2446 = vsel %vm55, %v2421, 0.0
  %v2447 = vadd.f32 %v2445, %v2446
  %v2448 = vsel %vm55, %v2422, 0.0
  %v2449 = vadd.f32 %v2447, %v2448
  %v2450 = vsel %vm55, %v2423, 0.0
  %v2451 = vadd.f32 %v2449, %v2450
  %v2452 = vsel %vm55, %v2424, 0.0
  %v2453 = vadd.f32 %v2451, %v2452
  %v2454 = vsel %vm55, %v2425, 0.0
  %v2455 = vadd.f32 %v2453, %v2454
  %v2456 = vsel %vm55, %v2426, 0.0
  %v2457 = vadd.f32 %v2455, %v2456
  %v2458 = vrot.slane %v2457, 4
  %v2459 = vadd.f32 %v2457, %v2458
  %v2460 = vrot.slane %v2459, 2
  %v2461 = vadd.f32 %v2459, %v2460
  %v2462 = vrot.slane %v2461, 1
  %v2463 = vadd.f32 %v2461, %v2462
  %v2464 = vmul.f32 %v2410, %v1273
  %v2465 = vmul.f32 %v2463, %v1273
  %v2466 = vmul.f32 %v2464, %v2464
  %v2467 = vsub.f32 %v2465, %v2466
  %v2468 = vmax.f32 %v2467, 0.0
  %v2469 = vld [vmem:[%s7] sm:$0x1]
  %v2470 = vadd.f32 %v2468, 1e-05
  %v2471 = vrsqrt.pop %v2470
  %v2472 = vmul.f32 %v2471, %v2470
  %v2473 = vmul.f32 %v2472, %v2471
  %v2474 = vmul.f32 0.5, %v2473
  %v2475 = vsub.f32 1.5, %v2474
  %v2476 = vmul.f32 %v2471, %v2475
  %vm2477 = vweird.f32 %v2470
  %vm2478 = vweird.f32 %v2471
  %vm2479 = vmor %vm2477, %vm2478
  %v2480 = vsel %vm2479, %v2471, %v2476
  %v2481 = vmul.f32 %v2469, %v2480
  %v2482 = vld [vmem:[%s8] sm:$0x1]
  %v2483 = vmul.f32 %v2464, %v2481
  %v2484 = vsub.f32 %v2482, %v2483
  %v2486 = vperm.slane %v2481, 0
  %v2488 = vmul.f32 %v2358, %v2486
  %v2489 = vmul.f32 %v2359, %v2486
  %v2490 = vmul.f32 %v2360, %v2486
  %v2491 = vmul.f32 %v2361, %v2486
  %v2492 = vmul.f32 %v2362, %v2486
  %v2493 = vmul.f32 %v2363, %v2486
  %v2494 = vmul.f32 %v2364, %v2486
  %v2495 = vmul.f32 %v2365, %v2486
  %v2496 = vmul.f32 %v2366, %v2486
  %v2497 = vmul.f32 %v2367, %v2486
  %v2498 = vmul.f32 %v2368, %v2486
  %v2499 = vmul.f32 %v2369, %v2486
  %v2500 = vmul.f32 %v2370, %v2486
  %v2501 = vmul.f32 %v2371, %v2486
  %v2502 = vmul.f32 %v2372, %v2486
  %v2503 = vmul.f32 %v2373, %v2486
  %v2505 = vperm.slane %v2484, 0
  %v2507 = vadd.f32 %v2488, %v2505
  %v2508 = vadd.f32 %v2489, %v2505
  %v2509 = vadd.f32 %v2490, %v2505
  %v2510 = vadd.f32 %v2491, %v2505
  %v2511 = vadd.f32 %v2492, %v2505
  %v2512 = vadd.f32 %v2493, %v2505
  %v2513 = vadd.f32 %v2494, %v2505
  %v2514 = vadd.f32 %v2495, %v2505
  %v2515 = vadd.f32 %v2496, %v2505
  %v2516 = vadd.f32 %v2497, %v2505
  %v2517 = vadd.f32 %v2498, %v2505
  %v2518 = vadd.f32 %v2499, %v2505
  %v2519 = vadd.f32 %v2500, %v2505
  %v2520 = vadd.f32 %v2501, %v2505
  %v2521 = vadd.f32 %v2502, %v2505
  %v2522 = vadd.f32 %v2503, %v2505
  %v2523 = vmax.f32 %v2507, 0.0
  %v2524 = vmax.f32 %v2508, 0.0
  %v2525 = vmax.f32 %v2509, 0.0
  %v2526 = vmax.f32 %v2510, 0.0
  %v2527 = vmax.f32 %v2511, 0.0
  %v2528 = vmax.f32 %v2512, 0.0
  %v2529 = vmax.f32 %v2513, 0.0
  %v2530 = vmax.f32 %v2514, 0.0
  %v2531 = vmax.f32 %v2515, 0.0
  %v2532 = vmax.f32 %v2516, 0.0
  %v2533 = vmax.f32 %v2517, 0.0
  %v2534 = vmax.f32 %v2518, 0.0
  %v2535 = vmax.f32 %v2519, 0.0
  %v2536 = vmax.f32 %v2520, 0.0
  %v2537 = vmax.f32 %v2521, 0.0
  %v2538 = vmax.f32 %v2522, 0.0
  %2539 = vst.msk [vmem:[%s9] sm:$0xff] %vm55, %v2523
  %2540 = vst.msk [vmem:[%s9 + $0x8] sm:$0xff] %vm55, %v2524
  %2541 = vst.msk [vmem:[%s9 + $0x10] sm:$0xff] %vm55, %v2525
  %2542 = vst.msk [vmem:[%s9 + $0x18] sm:$0xff] %vm55, %v2526
  %2543 = vst.msk [vmem:[%s9 + $0x20] sm:$0xff] %vm55, %v2527
  %2544 = vst.msk [vmem:[%s9 + $0x28] sm:$0xff] %vm55, %v2528
  %2545 = vst.msk [vmem:[%s9 + $0x30] sm:$0xff] %vm55, %v2529
  %2546 = vst.msk [vmem:[%s9 + $0x38] sm:$0xff] %vm55, %v2530
  %2547 = vst.msk [vmem:[%s9 + $0x40] sm:$0xff] %vm55, %v2531
  %2548 = vst.msk [vmem:[%s9 + $0x48] sm:$0xff] %vm55, %v2532
  %2549 = vst.msk [vmem:[%s9 + $0x50] sm:$0xff] %vm55, %v2533
  %2550 = vst.msk [vmem:[%s9 + $0x58] sm:$0xff] %vm55, %v2534
  %2551 = vst.msk [vmem:[%s9 + $0x60] sm:$0xff] %vm55, %v2535
  %2552 = vst.msk [vmem:[%s9 + $0x68] sm:$0xff] %vm55, %v2536
  %2553 = vst.msk [vmem:[%s9 + $0x70] sm:$0xff] %vm55, %v2537
  %2554 = vst.msk [vmem:[%s9 + $0x78] sm:$0xff] %vm55, %v2538
  // Predicated region
  $region38: #{overlap_patch_embed_forward.1} parent=0 // pred_check
    _
  $region39: #{overlap_patch_embed_forward.1} parent=0 // pred_check_branch
    %2556 = sbr.rel (0) target = $region41
  $region40: #{overlap_patch_embed_forward.1} parent=0 // pred_region
    _
  $region41: #{overlap_patch_embed_forward.1} parent=0 // pred_fallthru
    _
  // Predicated region
  $region42: #{overlap_patch_embed_forward.1} parent=0 // pred_check
    _
  $region43: #{overlap_patch_embed_forward.1} parent=0 // pred_check_branch
    %2558 = sbr.rel (0) target = $region45
  $region44: #{overlap_patch_embed_forward.1} parent=0 // pred_region
    _
  $region45: #{overlap_patch_embed_forward.1} parent=0 // pred_fallthru
    _

</llo_original>
